<compile_context>
chip_gen: v7x
topology: tpu7x:2x2x1
jax: 0.10.0
libtpu: 0.0.40
codegen_flags: <defaults>
</compile_context>

<pallas_src>
import jax
import jax.numpy as jnp
import numpy as np
from jax import lax
from jax.experimental import pallas as pl
from jax.experimental.pallas import tpu as pltpu


# ----------------------------------------------------------------------------- kernel

def classification_head_kernel(
        m_ref, e_ref, md_ref, dis_ref,                       # per-tile activations
        w1_ref, w1md_ref, w1dis_ref, b1_ref,                 # layer 1 (stacked [3D,H] + rank-1)
        w2_ref, b2_ref,                                      # layer 2
        w3p_ref, b3_ref,                                     # layer 3 (w3 padded to 8 rows)
        out_ref):                                            # [1, 1, tile_n] lane-dense scores
    f32 = jnp.float32
    bf16 = jnp.bfloat16

    m = m_ref[...]                       # [T, D] f32
    e = e_ref[...]                       # [T, D] f32
    me = m * e                           # f32 on the VPU (v5e has no bf16 VPU)

    # ---- Linear(4D+2, H): concat-free, (m-e) block merged into the weights.
    # Single K=3D matmul (K packs the 256-deep v6e/v7x MXU); bf16 operands, f32 acc.
    x = jnp.concatenate(
        [m.astype(bf16), e.astype(bf16), me.astype(bf16)], axis=1)     # [T, 3D], lane-aligned
    h = jnp.dot(x, w1_ref[...], preferred_element_type=f32)            # [T, H] f32
    # rank-1 md/dis columns + bias folded into one VPU expression; ReLU; Dropout = identity (eval)
    h = jnp.maximum(
        h + (md_ref[...] * w1md_ref[...] + dis_ref[...] * w1dis_ref[...] + b1_ref[...]),
        0.0)

    # ---- Linear(H, H) + ReLU (Dropout = identity in eval) ----
    h = jnp.dot(h.astype(bf16), w2_ref[...], preferred_element_type=f32) + b2_ref[...]
    h = jnp.maximum(h, 0.0)

    # ---- Linear(H, 1): w3 (zero-padded to 8 sublane rows) @ h^T -> lane-dense [8, T];
    # row 0 is the real score.  Kept in f32.
    s = lax.dot_general(w3p_ref[...], h, (((1,), (1,)), ((), ())),
                        preferred_element_type=f32)                    # [8, T]
    out_ref[0] = (s[0:1, :] + b3_ref[...]).astype(out_ref.dtype)        # [1, T] unmasked store


# ------------------------------------------------------------------- one-time weight prep

def prepare_classification_head_params(params):
    """Hoisted, one-time weight layout prep (torch nn.Linear layout in).

    params: w1 [H, 4D+2], b1 [H], w2 [H, H], b2 [H], w3 [1, H], b3 [1].
    Returns kernel-ready tensors; call once at parameter-load time, not per forward.
    """
    w1 = jnp.asarray(params["w1"], jnp.float32)
    b1 = jnp.asarray(params["b1"], jnp.float32)
    w2 = jnp.asarray(params["w2"], jnp.float32)
    b2 = jnp.asarray(params["b2"], jnp.float32)
    w3 = jnp.asarray(params["w3"], jnp.float32)
    b3 = jnp.asarray(params["b3"], jnp.float32)

    H = w1.shape[0]
    D = (w1.shape[1] - 2) // 4
    assert w1.shape[1] == 4 * D + 2
    assert D % 128 == 0 and H % 128 == 0, "lane-aligned D/H assumed (true for 128/768)"

    w1a = w1[:, 0 * D:1 * D]          # coeff of m
    w1b = w1[:, 1 * D:2 * D]          # coeff of e
    w1c = w1[:, 2 * D:3 * D]          # coeff of (m - e)  -> merged away
    w1d = w1[:, 3 * D:4 * D]          # coeff of (m * e)
    w_m, w_e, w_me = w1a + w1c, w1b - w1c, w1d

    # Stack as [3D, H] so layer 1 is ONE K-packed matmul.  bf16 for MXU throughput.
    w1_stack = jnp.concatenate([w_m.T, w_e.T, w_me.T], axis=0).astype(jnp.bfloat16)  # [3D, H]

    w1md = w1[:, 4 * D:4 * D + 1].T                      # [1, H] rank-1 md column (f32)
    w1dis = w1[:, 4 * D + 1:4 * D + 2].T                 # [1, H] rank-1 dis column (f32)
    b1r = b1.reshape(1, H)
    w2t = w2.T.astype(jnp.bfloat16)                      # [H, H] bf16
    b2r = b2.reshape(1, H)
    # w3 zero-padded to 8 sublane rows: clean MXU operand for the lane-dense last layer.
    w3p = jnp.zeros((8, H), jnp.float32).at[0].set(w3.reshape(H))
    b3r = b3.reshape(1, 1)

    return dict(w1=w1_stack, w1md=w1md, w1dis=w1dis, b1=b1r,
                w2=w2t, b2=b2r, w3p=w3p, b3=b3r)


# ------------------------------------------------------------------------------ wrapper

def classification_head_forward(mentions_repr, entities_repr, md_scores, dis_scores,
                                prepped, *, tile_n=None):
    """Fused ClassificationHead forward.  `prepped` from prepare_classification_head_params."""
    N, D = mentions_repr.shape
    H = prepped["w2"].shape[0]
    assert prepped["w1"].shape == (3 * D, H)

    if tile_n is None:
        # Large tiles amortize the ~0.35us/grid-step overhead, but keep >= 2 grid steps
        # so both v7x TensorCores get work under dimension_semantics=("parallel",).
        tile_n = max(128, min(512, 128 * pl.cdiv(pl.cdiv(N, 2), 128)))
    num_tiles = pl.cdiv(N, tile_n)       # no jnp.pad: Pallas masks the ragged tail block

    row_spec = pl.BlockSpec((tile_n, D), lambda i: (i, 0))
    col_spec = pl.BlockSpec((tile_n, 1), lambda i: (i, 0))
    full = lambda shape: pl.BlockSpec(shape, lambda i: (0, 0))     # weights: VMEM-resident

    out = pl.pallas_call(
        classification_head_kernel,
        out_shape=jax.ShapeDtypeStruct((num_tiles, 1, tile_n), jnp.float32),
        grid=(num_tiles,),
        in_specs=[
            row_spec, row_spec, col_spec, col_spec,
            full((3 * D, H)), full((1, H)), full((1, H)), full((1, H)),
            full((H, H)), full((1, H)),
            full((8, H)), full((1, 1)),
        ],
        out_specs=pl.BlockSpec((1, 1, tile_n), lambda i: (i, 0, 0)),   # lane-dense score rows
        compiler_params=pltpu.CompilerParams(
            dimension_semantics=("parallel",)),      # independent row tiles -> megacore / 2xTC
    )(mentions_repr, entities_repr, md_scores, dis_scores,
      prepped["w1"], prepped["w1md"], prepped["w1dis"], prepped["b1"],
      prepped["w2"], prepped["b2"], prepped["w3p"], prepped["b3"])

    return out.reshape(num_tiles * tile_n)[:N].reshape(N, 1)        # [N, 1], matches torch


# ---------------------------------------------------------------------------- reference

def reference_forward(mentions_repr, entities_repr, md_scores, dis_scores, params):
    feats = jnp.concatenate(
        [mentions_repr, entities_repr,
         mentions_repr - entities_repr, mentions_repr * entities_repr,
         md_scores, dis_scores], axis=1)                             # [N, 4D+2]
    h = jnp.maximum(feats @ params["w1"].T + params["b1"], 0.0)      # Dropout = identity (eval)
    h = jnp.maximum(h @ params["w2"].T + params["b2"], 0.0)
    return h @ params["w3"].T + params["b3"]                         # [N, 1]


if __name__ == "__main__":
    # Small shapes consistent with the module: ctxt_output_dim D = H = 128, N = 256 pairs.
    N, DIM = 256, 128

    key = jax.random.PRNGKey(0)
    ks = jax.random.split(key, 10)

    mentions_repr = jax.random.normal(ks[0], (N, DIM), dtype=jnp.float32)
    entities_repr = jax.random.normal(ks[1], (N, DIM), dtype=jnp.float32)
    md_scores = jax.random.normal(ks[2], (N, 1), dtype=jnp.float32)
    dis_scores = jax.random.normal(ks[3], (N, 1), dtype=jnp.float32)

    def init_linear(kw, kb, fan_in, fan_out):
        lim = 1.0 / np.sqrt(fan_in)
        w = jax.random.uniform(kw, (fan_out, fan_in), jnp.float32, -lim, lim)
        b = jax.random.uniform(kb, (fan_out,), jnp.float32, -lim, lim)
        return w, b

    w1, b1 = init_linear(ks[4], ks[5], 4 * DIM + 2, DIM)   # Linear(4D+2, D)
    w2, b2 = init_linear(ks[6], ks[7], DIM, DIM)           # Linear(D, D)
    w3, b3 = init_linear(ks[8], ks[9], DIM, 1)             # Linear(D, 1)
    params = dict(w1=w1, b1=b1, w2=w2, b2=b2, w3=w3, b3=b3)

    prepped = prepare_classification_head_params(params)   # hoisted, one-time weight prep
    out = classification_head_forward(mentions_repr, entities_repr,
                                      md_scores, dis_scores, prepped)
    out = jax.block_until_ready(out)

    ref = reference_forward(mentions_repr, entities_repr, md_scores, dis_scores, params)
    # bf16 matmul operands loosen the tolerance vs the pure-f32 reference (~1e-2 level).
    np.testing.assert_allclose(np.asarray(out), np.asarray(ref), rtol=2e-2, atol=2e-2)
    print("KERNEL_OK")
</pallas_src>

<mosaic_0001>
module attributes {stable_mosaic.version = 11 : i64} {
  func.func @classification_head_kernel(%arg0: i32, %arg1: memref<128x128xf32, #tpu.memory_space<vmem>>, %arg2: memref<128x128xf32, #tpu.memory_space<vmem>>, %arg3: memref<128x1xf32, #tpu.memory_space<vmem>>, %arg4: memref<128x1xf32, #tpu.memory_space<vmem>>, %arg5: memref<384x128xbf16, #tpu.memory_space<vmem>>, %arg6: memref<1x128xf32, #tpu.memory_space<vmem>>, %arg7: memref<1x128xf32, #tpu.memory_space<vmem>>, %arg8: memref<1x128xf32, #tpu.memory_space<vmem>>, %arg9: memref<128x128xbf16, #tpu.memory_space<vmem>>, %arg10: memref<1x128xf32, #tpu.memory_space<vmem>>, %arg11: memref<8x128xf32, #tpu.memory_space<vmem>>, %arg12: memref<1x1xf32, #tpu.memory_space<vmem>>, %arg13: memref<1x1x128xf32, #tpu.memory_space<vmem>>) attributes {dimension_semantics = [#tpu.dimension_semantics<parallel>], iteration_bounds = array<i64: 2>, scalar_prefetch = 0 : i64, scratch_operands = 0 : i64, tpu.core_type = #tpu.core_type<tc>, window_params = [{transform_indices = @transform_0, window_bounds = array<i64: 128, 128>}, {transform_indices = @transform_1, window_bounds = array<i64: 128, 128>}, {transform_indices = @transform_2, window_bounds = array<i64: 128, 1>}, {transform_indices = @transform_3, window_bounds = array<i64: 128, 1>}, {pipeline_mode = #tpu.pipeline_mode<synchronous>, transform_indices = @transform_4, window_bounds = array<i64: 384, 128>}, {pipeline_mode = #tpu.pipeline_mode<synchronous>, transform_indices = @transform_5, window_bounds = array<i64: 1, 128>}, {pipeline_mode = #tpu.pipeline_mode<synchronous>, transform_indices = @transform_6, window_bounds = array<i64: 1, 128>}, {pipeline_mode = #tpu.pipeline_mode<synchronous>, transform_indices = @transform_7, window_bounds = array<i64: 1, 128>}, {pipeline_mode = #tpu.pipeline_mode<synchronous>, transform_indices = @transform_8, window_bounds = array<i64: 128, 128>}, {pipeline_mode = #tpu.pipeline_mode<synchronous>, transform_indices = @transform_9, window_bounds = array<i64: 1, 128>}, {pipeline_mode = #tpu.pipeline_mode<synchronous>, transform_indices = @transform_10, window_bounds = array<i64: 8, 128>}, {pipeline_mode = #tpu.pipeline_mode<synchronous>, transform_indices = @transform_11, window_bounds = array<i64: 1, 1>}, {transform_indices = @transform_12, window_bounds = array<i64: 1, 1, 128>}]} {
    %c0 = arith.constant 0 : index
    %c0_0 = arith.constant 0 : index
    %0 = vector.load %arg1[%c0, %c0_0] : memref<128x128xf32, #tpu.memory_space<vmem>>, vector<128x128xf32>
    %c0_1 = arith.constant 0 : index
    %c0_2 = arith.constant 0 : index
    %1 = vector.load %arg2[%c0_1, %c0_2] : memref<128x128xf32, #tpu.memory_space<vmem>>, vector<128x128xf32>
    %2 = arith.mulf %0, %1 : vector<128x128xf32>
    %3 = arith.truncf %0 : vector<128x128xf32> to vector<128x128xbf16>
    %4 = arith.truncf %1 : vector<128x128xf32> to vector<128x128xbf16>
    %5 = arith.truncf %2 : vector<128x128xf32> to vector<128x128xbf16>
    %6 = tpu.concatenate %3, %4, %5 in 1 : vector<128x128xbf16>, vector<128x128xbf16>, vector<128x128xbf16> -> vector<128x384xbf16>
    %c0_3 = arith.constant 0 : index
    %c0_4 = arith.constant 0 : index
    %7 = vector.load %arg5[%c0_3, %c0_4] : memref<384x128xbf16, #tpu.memory_space<vmem>>, vector<384x128xbf16>
    %cst = arith.constant dense<0.000000e+00> : vector<128x128xf32>
    %8 = tpu.matmul %6, %7, %cst {dimension_numbers = #tpu.dot_dimension_numbers<[1], [0], [0], [1], [0, 0, 1, 1], [], []>} : vector<128x384xbf16>, vector<384x128xbf16>, vector<128x128xf32> -> vector<128x128xf32>
    %c0_5 = arith.constant 0 : index
    %c0_6 = arith.constant 0 : index
    %9 = vector.load %arg3[%c0_5, %c0_6] : memref<128x1xf32, #tpu.memory_space<vmem>>, vector<128x1xf32>
    %c0_7 = arith.constant 0 : index
    %c0_8 = arith.constant 0 : index
    %10 = vector.load %arg6[%c0_7, %c0_8] : memref<1x128xf32, #tpu.memory_space<vmem>>, vector<1x128xf32>
    %11 = vector.broadcast %9 : vector<128x1xf32> to vector<128x128xf32>
    %12 = vector.broadcast %10 : vector<1x128xf32> to vector<128x128xf32>
    %13 = arith.mulf %11, %12 : vector<128x128xf32>
    %c0_9 = arith.constant 0 : index
    %c0_10 = arith.constant 0 : index
    %14 = vector.load %arg4[%c0_9, %c0_10] : memref<128x1xf32, #tpu.memory_space<vmem>>, vector<128x1xf32>
    %c0_11 = arith.constant 0 : index
    %c0_12 = arith.constant 0 : index
    %15 = vector.load %arg7[%c0_11, %c0_12] : memref<1x128xf32, #tpu.memory_space<vmem>>, vector<1x128xf32>
    %16 = vector.broadcast %14 : vector<128x1xf32> to vector<128x128xf32>
    %17 = vector.broadcast %15 : vector<1x128xf32> to vector<128x128xf32>
    %18 = arith.mulf %16, %17 : vector<128x128xf32>
    %19 = arith.addf %13, %18 : vector<128x128xf32>
    %c0_13 = arith.constant 0 : index
    %c0_14 = arith.constant 0 : index
    %20 = vector.load %arg8[%c0_13, %c0_14] : memref<1x128xf32, #tpu.memory_space<vmem>>, vector<1x128xf32>
    %21 = vector.broadcast %20 : vector<1x128xf32> to vector<128x128xf32>
    %22 = arith.addf %19, %21 : vector<128x128xf32>
    %23 = arith.addf %8, %22 : vector<128x128xf32>
    %cst_15 = arith.constant 0.000000e+00 : f32
    %24 = vector.broadcast %cst_15 : f32 to vector<128x128xf32>
    %25 = arith.maximumf %23, %24 : vector<128x128xf32>
    %26 = arith.truncf %25 : vector<128x128xf32> to vector<128x128xbf16>
    %c0_16 = arith.constant 0 : index
    %c0_17 = arith.constant 0 : index
    %27 = vector.load %arg9[%c0_16, %c0_17] : memref<128x128xbf16, #tpu.memory_space<vmem>>, vector<128x128xbf16>
    %cst_18 = arith.constant dense<0.000000e+00> : vector<128x128xf32>
    %28 = tpu.matmul %26, %27, %cst_18 {dimension_numbers = #tpu.dot_dimension_numbers<[1], [0], [0], [1], [0, 0, 1, 1], [], []>} : vector<128x128xbf16>, vector<128x128xbf16>, vector<128x128xf32> -> vector<128x128xf32>
    %c0_19 = arith.constant 0 : index
    %c0_20 = arith.constant 0 : index
    %29 = vector.load %arg10[%c0_19, %c0_20] : memref<1x128xf32, #tpu.memory_space<vmem>>, vector<1x128xf32>
    %30 = vector.broadcast %29 : vector<1x128xf32> to vector<128x128xf32>
    %31 = arith.addf %28, %30 : vector<128x128xf32>
    %cst_21 = arith.constant 0.000000e+00 : f32
    %32 = vector.broadcast %cst_21 : f32 to vector<128x128xf32>
    %33 = arith.maximumf %31, %32 : vector<128x128xf32>
    %c0_22 = arith.constant 0 : index
    %c0_23 = arith.constant 0 : index
    %34 = vector.load %arg11[%c0_22, %c0_23] : memref<8x128xf32, #tpu.memory_space<vmem>>, vector<8x128xf32>
    %cst_24 = arith.constant dense<0.000000e+00> : vector<8x128xf32>
    %35 = tpu.matmul %34, %33, %cst_24 {dimension_numbers = #tpu.dot_dimension_numbers<[1], [1], [0], [0], [0, 0, 1, 0], [], []>} : vector<8x128xf32>, vector<128x128xf32>, vector<8x128xf32> -> vector<8x128xf32>
    %36 = vector.extract_strided_slice %35 {offsets = [0, 0], sizes = [1, 128], strides = [1, 1]} : vector<8x128xf32> to vector<1x128xf32>
    %c0_25 = arith.constant 0 : index
    %c0_26 = arith.constant 0 : index
    %37 = vector.load %arg12[%c0_25, %c0_26] : memref<1x1xf32, #tpu.memory_space<vmem>>, vector<1x1xf32>
    %38 = vector.broadcast %37 : vector<1x1xf32> to vector<1x128xf32>
    %39 = arith.addf %36, %38 : vector<1x128xf32>
    %c0_27 = arith.constant 0 : index
    %c0_28 = arith.constant 0 : index
    %c0_29 = arith.constant 0 : index
    %40 = vector.load %arg13[%c0_27, %c0_28, %c0_29] : memref<1x1x128xf32, #tpu.memory_space<vmem>>, vector<1x1x128xf32>
    %41 = vector.shape_cast %40 : vector<1x1x128xf32> to vector<1x128xf32>
    %42 = vector.shape_cast %39 : vector<1x128xf32> to vector<1x1x128xf32>
    tpu.vector_store %arg13[%c0_27, %c0_28, %c0_29], %42 {strides = array<i32>} : memref<1x1x128xf32, #tpu.memory_space<vmem>>, vector<1x1x128xf32>,
    return
  }
  func.func @transform_0(%arg0: i32) -> (i32, i32) {
    %c0_i32 = arith.constant 0 : i32
    %c0_i32_0 = arith.constant 0 : i32
    return %arg0, %c0_i32 : i32, i32
  }
  func.func @transform_1(%arg0: i32) -> (i32, i32) {
    %c0_i32 = arith.constant 0 : i32
    %c0_i32_0 = arith.constant 0 : i32
    return %arg0, %c0_i32 : i32, i32
  }
  func.func @transform_2(%arg0: i32) -> (i32, i32) {
    %c0_i32 = arith.constant 0 : i32
    %c0_i32_0 = arith.constant 0 : i32
    return %arg0, %c0_i32 : i32, i32
  }
  func.func @transform_3(%arg0: i32) -> (i32, i32) {
    %c0_i32 = arith.constant 0 : i32
    %c0_i32_0 = arith.constant 0 : i32
    return %arg0, %c0_i32 : i32, i32
  }
  func.func @transform_4(%arg0: i32) -> (i32, i32) {
    %c0_i32 = arith.constant 0 : i32
    %c0_i32_0 = arith.constant 0 : i32
    %c0_i32_1 = arith.constant 0 : i32
    return %c0_i32, %c0_i32_0 : i32, i32
  }
  func.func @transform_5(%arg0: i32) -> (i32, i32) {
    %c0_i32 = arith.constant 0 : i32
    %c0_i32_0 = arith.constant 0 : i32
    %c0_i32_1 = arith.constant 0 : i32
    return %c0_i32, %c0_i32_0 : i32, i32
  }
  func.func @transform_6(%arg0: i32) -> (i32, i32) {
    %c0_i32 = arith.constant 0 : i32
    %c0_i32_0 = arith.constant 0 : i32
    %c0_i32_1 = arith.constant 0 : i32
    return %c0_i32, %c0_i32_0 : i32, i32
  }
  func.func @transform_7(%arg0: i32) -> (i32, i32) {
    %c0_i32 = arith.constant 0 : i32
    %c0_i32_0 = arith.constant 0 : i32
    %c0_i32_1 = arith.constant 0 : i32
    return %c0_i32, %c0_i32_0 : i32, i32
  }
  func.func @transform_8(%arg0: i32) -> (i32, i32) {
    %c0_i32 = arith.constant 0 : i32
    %c0_i32_0 = arith.constant 0 : i32
    %c0_i32_1 = arith.constant 0 : i32
    return %c0_i32, %c0_i32_0 : i32, i32
  }
  func.func @transform_9(%arg0: i32) -> (i32, i32) {
    %c0_i32 = arith.constant 0 : i32
    %c0_i32_0 = arith.constant 0 : i32
    %c0_i32_1 = arith.constant 0 : i32
    return %c0_i32, %c0_i32_0 : i32, i32
  }
  func.func @transform_10(%arg0: i32) -> (i32, i32) {
    %c0_i32 = arith.constant 0 : i32
    %c0_i32_0 = arith.constant 0 : i32
    %c0_i32_1 = arith.constant 0 : i32
    return %c0_i32, %c0_i32_0 : i32, i32
  }
  func.func @transform_11(%arg0: i32) -> (i32, i32) {
    %c0_i32 = arith.constant 0 : i32
    %c0_i32_0 = arith.constant 0 : i32
    %c0_i32_1 = arith.constant 0 : i32
    return %c0_i32, %c0_i32_0 : i32, i32
  }
  func.func @transform_12(%arg0: i32) -> (i32, i32, i32) {
    %c0_i32 = arith.constant 0 : i32
    %c0_i32_0 = arith.constant 0 : i32
    %c0_i32_1 = arith.constant 0 : i32
    return %arg0, %c0_i32, %c0_i32_0 : i32, i32, i32
  }
}

</mosaic_0001>

<llo_original>
// kernel: tpu_custom_call.1
$region0: #{tpu_custom_call.1}
  #allocation0 [shape = 'u32[]', space=smem, size = 0x4, offset = 0x4, fixed_abs, tag = 'smem constant byte address 0x4 - core index']
  #allocation1 [shape = 'u32[144,128]{1,0:T(1,128)}', space=vmem, size = 0x12000, scoped, tag = 'internal scratch']
  #allocation2 [shape = 'f32[1,1]{1,0:T(1,128)S(1)}', space=vmem, size = 0x200, scoped, tag = 'scoped memory for tpu_custom_call.1']
  %s0 = inlined_call_operand.vmem [shape: f32[256,128], index: 0, kind: input, shape index: {}]
  %s1 = inlined_call_operand.vmem [shape: f32[256,128], index: 1, kind: input, shape index: {}]
  %s2 = inlined_call_operand.vmem [shape: f32[256,1], index: 2, kind: input, shape index: {}]
  %s3 = inlined_call_operand.vmem [shape: f32[256,1], index: 3, kind: input, shape index: {}]
  %s4 = inlined_call_operand.hbm [shape: bf16[384,128], index: 4, kind: input, shape index: {}]
  %s5 = inlined_call_operand.vmem [shape: f32[1,128], index: 5, kind: input, shape index: {}]
  %s6 = inlined_call_operand.vmem [shape: f32[1,128], index: 6, kind: input, shape index: {}]
  %s7 = inlined_call_operand.vmem [shape: f32[1,128], index: 7, kind: input, shape index: {}]
  %s8 = inlined_call_operand.hbm [shape: bf16[128,128], index: 8, kind: input, shape index: {}]
  %s9 = inlined_call_operand.vmem [shape: f32[1,128], index: 9, kind: input, shape index: {}]
  %s10 = inlined_call_operand.vmem [shape: f32[8,128], index: 10, kind: input, shape index: {}]
  %s11 = inlined_call_operand.<no memory space> [shape: f32[1,1], index: 11, kind: input, shape index: {}]
  %s12 = inlined_call_operand.hbm [shape: f32[2,1,128], index: 12, kind: output, shape index: {}]
  %s13 = sld [smem:[#allocation0]]
  $region89: #{tpu_custom_call.1} parent=0
    _
  %s15 = ssub.s32 1, %s13
  %s16 = scalar_select 0, %s15, %s13
  %v17 = vstv %s11
  %18 = vst [vmem:[#allocation2] sm:$0x1] %v17
  $region1: #{tpu_custom_call.1} parent=0
    #allocation3 [shape = 'u8[98304]{0}', space=vmem, size = 0x18000, scoped, tag = 'input window, operand 4, single buffered']
    #allocation4 [shape = 's32[2]{0}', space=sflag, size = 0x8, scoped, tag = 'scoped memory for tpu_custom_call.1']
    #allocation5 [shape = 's32[2]{0}', space=sflag, size = 0x8, scoped, tag = 'scoped memory for tpu_custom_call.1']
    #allocation6 [shape = 'u8[32768]{0}', space=vmem, size = 0x8000, scoped, tag = 'input window, operand 8, single buffered']
    #allocation7 [shape = 's32[1]{0}', space=sflag, size = 0x4, scoped, tag = 'scoped memory for tpu_custom_call.1']
    #allocation8 [shape = 'u8[1024]{0}', space=vmem, size = 0x400, scoped, tag = 'output window, operand 0']
    %19 = vsyncpa [#allocation4], 0
    %20 = vsyncpa [#allocation7], 0
    %21 = vsyncpa [#allocation5], 0
    %s22 = scalar_lea.sflag [#allocation5], 1
    %23 = vsyncpa %s22, 0
    loop: start=0, step=1, limit=4
    $region2: #{tpu_custom_call.1} parent=1 // loop_pre_header
      _
    $region3: #{tpu_custom_call.1} parent=1 // loop_header
      %s25 = sphi 0, %s29
      %p26 = scmp.ge.s32.totalorder %s25, 4
      %s35 = sphi 0, %s37
      %s38 = sphi 0, %s35
      %s39 = sphi 0, %s38
      %s55 = sphi 0, %s39
      %s61 = sphi 0, %s63
      %s64 = sphi 0, %s61
      %s65 = sphi 0, %s64
      %s81 = sphi 0, %s65
      %s87 = sphi 0, %s89
      %s90 = sphi 0, %s87
      %s91 = sphi 0, %s90
      %s107 = sphi 0, %s91
      %s113 = sphi 0, %s115
      %s116 = sphi 0, %s113
      %s117 = sphi 0, %s116
      %s133 = sphi 0, %s117
      %s137 = sphi 0, %s137
      %s139 = sphi 0, %s137
      %s140 = sphi 0, %s139
      %s154 = sphi 0, %s140
      %s158 = sphi 0, %s158
      %s160 = sphi 0, %s158
      %s161 = sphi 0, %s160
      %s175 = sphi 0, %s161
      %s179 = sphi 0, %s179
      %s181 = sphi 0, %s179
      %s182 = sphi 0, %s181
      %s196 = sphi 0, %s182
      %s200 = sphi 0, %s200
      %s202 = sphi 0, %s200
      %s203 = sphi 0, %s202
      %s217 = sphi 0, %s203
      %s221 = sphi 0, %s221
      %s223 = sphi 0, %s221
      %s224 = sphi 0, %s223
      %s238 = sphi 0, %s224
      %s242 = sphi 0, %s242
      %s244 = sphi 0, %s242
      %s245 = sphi 0, %s244
      %s259 = sphi 0, %s245
      %s263 = sphi 0, %s263
      %s265 = sphi 0, %s263
      %s266 = sphi 0, %s265
      %s280 = sphi 0, %s266
      %s284 = sphi 0, %s284
      %s286 = sphi 0, %s284
      %s287 = sphi 0, %s286
      %s301 = sphi 0, %s287
      %s307 = sphi 0, %s309
      %s310 = sphi 0, %s307
      %s311 = sphi 0, %s310
      %s327 = sphi 0, %s311
    $region4: #{tpu_custom_call.1} parent=1 // loop_header_branch
      %28 = sbr.rel (%p26) target = $region8
    $region5: #{tpu_custom_call.1} parent=1 // loop_body
      %s30 = ssub.s32 %s25, 1
      %s31 = ssub.s32 %s25, 2
      %s32 = sadd.s32 %s25, 1
      %s33 = ssub.s32 %s25, %s32
      %p34 = scmp.eq.s32.totalorder %s33, 0
      %s36 = sadd.s32 %s35, 1
      %s37 = scalar_select %p34, %s35, %s36
      %p40 = pneg %p34
      %p41 = scmp.eq.s32.totalorder %s25, 1
      %p42 = por %p40, %p41
      %p43 = scmp.ne.s32.totalorder %s35, %s38
      %p44 = scmp.eq.s32.totalorder %s25, 0
      %p45 = por %p43, %p44
      %p46 = scmp.ne.s32.totalorder %s35, %s38
      %p47 = scmp.eq.s32.totalorder %s30, 1
      %p48 = por %p46, %p47
      %p49 = scmp.ne.s32.totalorder %s38, %s39
      %p50 = scmp.eq.s32.totalorder %s30, 0
      %p51 = por %p49, %p50
      %p52 = scmp.ne.s32.totalorder %s38, %s39
      %p53 = scmp.eq.s32.totalorder %s31, 1
      %p54 = por %p52, %p53
      %p56 = scmp.ne.s32.totalorder %s39, %s55
      %p57 = scmp.eq.s32.totalorder %s31, 0
      %p58 = por %p56, %p57
      %s59 = ssub.s32 %s25, %s32
      %p60 = scmp.eq.s32.totalorder %s59, 0
      %s62 = sadd.s32 %s61, 1
      %s63 = scalar_select %p60, %s61, %s62
      %p66 = pneg %p60
      %p67 = scmp.eq.s32.totalorder %s25, 1
      %p68 = por %p66, %p67
      %p69 = scmp.ne.s32.totalorder %s61, %s64
      %p70 = scmp.eq.s32.totalorder %s25, 0
      %p71 = por %p69, %p70
      %p72 = scmp.ne.s32.totalorder %s61, %s64
      %p73 = scmp.eq.s32.totalorder %s30, 1
      %p74 = por %p72, %p73
      %p75 = scmp.ne.s32.totalorder %s64, %s65
      %p76 = scmp.eq.s32.totalorder %s30, 0
      %p77 = por %p75, %p76
      %p78 = scmp.ne.s32.totalorder %s64, %s65
      %p79 = scmp.eq.s32.totalorder %s31, 1
      %p80 = por %p78, %p79
      %p82 = scmp.ne.s32.totalorder %s65, %s81
      %p83 = scmp.eq.s32.totalorder %s31, 0
      %p84 = por %p82, %p83
      %s85 = ssub.s32 %s25, %s32
      %p86 = scmp.eq.s32.totalorder %s85, 0
      %s88 = sadd.s32 %s87, 1
      %s89 = scalar_select %p86, %s87, %s88
      %p92 = pneg %p86
      %p93 = scmp.eq.s32.totalorder %s25, 1
      %p94 = por %p92, %p93
      %p95 = scmp.ne.s32.totalorder %s87, %s90
      %p96 = scmp.eq.s32.totalorder %s25, 0
      %p97 = por %p95, %p96
      %p98 = scmp.ne.s32.totalorder %s87, %s90
      %p99 = scmp.eq.s32.totalorder %s30, 1
      %p100 = por %p98, %p99
      %p101 = scmp.ne.s32.totalorder %s90, %s91
      %p102 = scmp.eq.s32.totalorder %s30, 0
      %p103 = por %p101, %p102
      %p104 = scmp.ne.s32.totalorder %s90, %s91
      %p105 = scmp.eq.s32.totalorder %s31, 1
      %p106 = por %p104, %p105
      %p108 = scmp.ne.s32.totalorder %s91, %s107
      %p109 = scmp.eq.s32.totalorder %s31, 0
      %p110 = por %p108, %p109
      %s111 = ssub.s32 %s25, %s32
      %p112 = scmp.eq.s32.totalorder %s111, 0
      %s114 = sadd.s32 %s113, 1
      %s115 = scalar_select %p112, %s113, %s114
      %p118 = pneg %p112
      %p119 = scmp.eq.s32.totalorder %s25, 1
      %p120 = por %p118, %p119
      %p121 = scmp.ne.s32.totalorder %s113, %s116
      %p122 = scmp.eq.s32.totalorder %s25, 0
      %p123 = por %p121, %p122
      %p124 = scmp.ne.s32.totalorder %s113, %s116
      %p125 = scmp.eq.s32.totalorder %s30, 1
      %p126 = por %p124, %p125
      %p127 = scmp.ne.s32.totalorder %s116, %s117
      %p128 = scmp.eq.s32.totalorder %s30, 0
      %p129 = por %p127, %p128
      %p130 = scmp.ne.s32.totalorder %s116, %s117
      %p131 = scmp.eq.s32.totalorder %s31, 1
      %p132 = por %p130, %p131
      %p134 = scmp.ne.s32.totalorder %s117, %s133
      %p135 = scmp.eq.s32.totalorder %s31, 0
      %p136 = por %p134, %p135
      %s138 = sadd.s32 %s137, 1
      %p141 = scmp.eq.s32.totalorder %s25, 1
      %p142 = scmp.ne.s32.totalorder %s137, %s139
      %p143 = scmp.eq.s32.totalorder %s25, 0
      %p144 = por %p142, %p143
      %p145 = scmp.ne.s32.totalorder %s137, %s139
      %p146 = scmp.eq.s32.totalorder %s30, 1
      %p147 = por %p145, %p146
      %p148 = scmp.ne.s32.totalorder %s139, %s140
      %p149 = scmp.eq.s32.totalorder %s30, 0
      %p150 = por %p148, %p149
      %p151 = scmp.ne.s32.totalorder %s139, %s140
      %p152 = scmp.eq.s32.totalorder %s31, 1
      %p153 = por %p151, %p152
      %p155 = scmp.ne.s32.totalorder %s140, %s154
      %p156 = scmp.eq.s32.totalorder %s31, 0
      %p157 = por %p155, %p156
      %s159 = sadd.s32 %s158, 1
      %p162 = scmp.eq.s32.totalorder %s25, 1
      %p163 = scmp.ne.s32.totalorder %s158, %s160
      %p164 = scmp.eq.s32.totalorder %s25, 0
      %p165 = por %p163, %p164
      %p166 = scmp.ne.s32.totalorder %s158, %s160
      %p167 = scmp.eq.s32.totalorder %s30, 1
      %p168 = por %p166, %p167
      %p169 = scmp.ne.s32.totalorder %s160, %s161
      %p170 = scmp.eq.s32.totalorder %s30, 0
      %p171 = por %p169, %p170
      %p172 = scmp.ne.s32.totalorder %s160, %s161
      %p173 = scmp.eq.s32.totalorder %s31, 1
      %p174 = por %p172, %p173
      %p176 = scmp.ne.s32.totalorder %s161, %s175
      %p177 = scmp.eq.s32.totalorder %s31, 0
      %p178 = por %p176, %p177
      %s180 = sadd.s32 %s179, 1
      %p183 = scmp.eq.s32.totalorder %s25, 1
      %p184 = scmp.ne.s32.totalorder %s179, %s181
      %p185 = scmp.eq.s32.totalorder %s25, 0
      %p186 = por %p184, %p185
      %p187 = scmp.ne.s32.totalorder %s179, %s181
      %p188 = scmp.eq.s32.totalorder %s30, 1
      %p189 = por %p187, %p188
      %p190 = scmp.ne.s32.totalorder %s181, %s182
      %p191 = scmp.eq.s32.totalorder %s30, 0
      %p192 = por %p190, %p191
      %p193 = scmp.ne.s32.totalorder %s181, %s182
      %p194 = scmp.eq.s32.totalorder %s31, 1
      %p195 = por %p193, %p194
      %p197 = scmp.ne.s32.totalorder %s182, %s196
      %p198 = scmp.eq.s32.totalorder %s31, 0
      %p199 = por %p197, %p198
      %s201 = sadd.s32 %s200, 1
      %p204 = scmp.eq.s32.totalorder %s25, 1
      %p205 = scmp.ne.s32.totalorder %s200, %s202
      %p206 = scmp.eq.s32.totalorder %s25, 0
      %p207 = por %p205, %p206
      %p208 = scmp.ne.s32.totalorder %s200, %s202
      %p209 = scmp.eq.s32.totalorder %s30, 1
      %p210 = por %p208, %p209
      %p211 = scmp.ne.s32.totalorder %s202, %s203
      %p212 = scmp.eq.s32.totalorder %s30, 0
      %p213 = por %p211, %p212
      %p214 = scmp.ne.s32.totalorder %s202, %s203
      %p215 = scmp.eq.s32.totalorder %s31, 1
      %p216 = por %p214, %p215
      %p218 = scmp.ne.s32.totalorder %s203, %s217
      %p219 = scmp.eq.s32.totalorder %s31, 0
      %p220 = por %p218, %p219
      %s222 = sadd.s32 %s221, 1
      %p225 = scmp.eq.s32.totalorder %s25, 1
      %p226 = scmp.ne.s32.totalorder %s221, %s223
      %p227 = scmp.eq.s32.totalorder %s25, 0
      %p228 = por %p226, %p227
      %p229 = scmp.ne.s32.totalorder %s221, %s223
      %p230 = scmp.eq.s32.totalorder %s30, 1
      %p231 = por %p229, %p230
      %p232 = scmp.ne.s32.totalorder %s223, %s224
      %p233 = scmp.eq.s32.totalorder %s30, 0
      %p234 = por %p232, %p233
      %p235 = scmp.ne.s32.totalorder %s223, %s224
      %p236 = scmp.eq.s32.totalorder %s31, 1
      %p237 = por %p235, %p236
      %p239 = scmp.ne.s32.totalorder %s224, %s238
      %p240 = scmp.eq.s32.totalorder %s31, 0
      %p241 = por %p239, %p240
      %s243 = sadd.s32 %s242, 1
      %p246 = scmp.eq.s32.totalorder %s25, 1
      %p247 = scmp.ne.s32.totalorder %s242, %s244
      %p248 = scmp.eq.s32.totalorder %s25, 0
      %p249 = por %p247, %p248
      %p250 = scmp.ne.s32.totalorder %s242, %s244
      %p251 = scmp.eq.s32.totalorder %s30, 1
      %p252 = por %p250, %p251
      %p253 = scmp.ne.s32.totalorder %s244, %s245
      %p254 = scmp.eq.s32.totalorder %s30, 0
      %p255 = por %p253, %p254
      %p256 = scmp.ne.s32.totalorder %s244, %s245
      %p257 = scmp.eq.s32.totalorder %s31, 1
      %p258 = por %p256, %p257
      %p260 = scmp.ne.s32.totalorder %s245, %s259
      %p261 = scmp.eq.s32.totalorder %s31, 0
      %p262 = por %p260, %p261
      %s264 = sadd.s32 %s263, 1
      %p267 = scmp.eq.s32.totalorder %s25, 1
      %p268 = scmp.ne.s32.totalorder %s263, %s265
      %p269 = scmp.eq.s32.totalorder %s25, 0
      %p270 = por %p268, %p269
      %p271 = scmp.ne.s32.totalorder %s263, %s265
      %p272 = scmp.eq.s32.totalorder %s30, 1
      %p273 = por %p271, %p272
      %p274 = scmp.ne.s32.totalorder %s265, %s266
      %p275 = scmp.eq.s32.totalorder %s30, 0
      %p276 = por %p274, %p275
      %p277 = scmp.ne.s32.totalorder %s265, %s266
      %p278 = scmp.eq.s32.totalorder %s31, 1
      %p279 = por %p277, %p278
      %p281 = scmp.ne.s32.totalorder %s266, %s280
      %p282 = scmp.eq.s32.totalorder %s31, 0
      %p283 = por %p281, %p282
      %s285 = sadd.s32 %s284, 1
      %p288 = scmp.eq.s32.totalorder %s25, 1
      %p289 = scmp.ne.s32.totalorder %s284, %s286
      %p290 = scmp.eq.s32.totalorder %s25, 0
      %p291 = por %p289, %p290
      %p292 = scmp.ne.s32.totalorder %s284, %s286
      %p293 = scmp.eq.s32.totalorder %s30, 1
      %p294 = por %p292, %p293
      %p295 = scmp.ne.s32.totalorder %s286, %s287
      %p296 = scmp.eq.s32.totalorder %s30, 0
      %p297 = por %p295, %p296
      %p298 = scmp.ne.s32.totalorder %s286, %s287
      %p299 = scmp.eq.s32.totalorder %s31, 1
      %p300 = por %p298, %p299
      %p302 = scmp.ne.s32.totalorder %s287, %s301
      %p303 = scmp.eq.s32.totalorder %s31, 0
      %p304 = por %p302, %p303
      %s305 = ssub.s32 %s25, %s32
      %p306 = scmp.eq.s32.totalorder %s305, 0
      %s308 = sadd.s32 %s307, 1
      %s309 = scalar_select %p306, %s307, %s308
      %p312 = pneg %p306
      %p313 = scmp.eq.s32.totalorder %s25, 1
      %p314 = por %p312, %p313
      %p315 = scmp.ne.s32.totalorder %s307, %s310
      %p316 = scmp.eq.s32.totalorder %s25, 0
      %p317 = por %p315, %p316
      %p318 = scmp.ne.s32.totalorder %s307, %s310
      %p319 = scmp.eq.s32.totalorder %s30, 1
      %p320 = por %p318, %p319
      %p321 = scmp.ne.s32.totalorder %s310, %s311
      %p322 = scmp.eq.s32.totalorder %s30, 0
      %p323 = por %p321, %p322
      %p324 = scmp.ne.s32.totalorder %s310, %s311
      %p325 = scmp.eq.s32.totalorder %s31, 1
      %p326 = por %p324, %p325
      %p328 = scmp.ne.s32.totalorder %s311, %s327
      %p329 = scmp.eq.s32.totalorder %s31, 0
      %p330 = por %p328, %p329
      %p331 = scmp.le.s32.totalorder 1, %s25
      %p332 = scmp.lt.s32.totalorder %s25, 3
      %p333 = pnand %p331, %p332
      %p334 = pneg %p333
      // Predicated region
      $region9: #{tpu_custom_call.1} parent=5 // pred_check
        _
      $region10: #{tpu_custom_call.1} parent=5 // pred_check_branch
        %336 = sbr.rel (%p333) target = $region12
      $region11: #{tpu_custom_call.1} parent=5 // pred_region
        %s337 = ssub.s32 %s25, 1
        // Predicated region
        $region13: #{tpu_custom_call.1} parent=11 // pred_check
          %p338 = pneg %p150
        $region14: #{tpu_custom_call.1} parent=11 // pred_check_branch
          %340 = sbr.rel (%p338) target = $region16
        $region15: #{tpu_custom_call.1} parent=11 // pred_region
          %s342 = ssub.s32 3072, 3072
          %343 = vsyncadd [#allocation4], %s342
          %s344 = sshll.u32 [#allocation3], 4
          %s345 = int_to_ptr.vmem [resolvable:$true] %s344
          %350 = dma.hbm_to_vmem [thread:$0]  %s4, 3072, %s345, [#allocation4], 64, 64, 4
        $region16: #{tpu_custom_call.1} parent=11 // pred_fallthru
          _
        // Predicated region
        $region17: #{tpu_custom_call.1} parent=11 // pred_check
          %p351 = pneg %p171
        $region18: #{tpu_custom_call.1} parent=11 // pred_check_branch
          %353 = sbr.rel (%p351) target = $region20
        $region19: #{tpu_custom_call.1} parent=11 // pred_region
          _
        $region20: #{tpu_custom_call.1} parent=11 // pred_fallthru
          _
        // Predicated region
        $region21: #{tpu_custom_call.1} parent=11 // pred_check
          %p354 = pneg %p192
        $region22: #{tpu_custom_call.1} parent=11 // pred_check_branch
          %356 = sbr.rel (%p354) target = $region24
        $region23: #{tpu_custom_call.1} parent=11 // pred_region
          _
        $region24: #{tpu_custom_call.1} parent=11 // pred_fallthru
          _
        // Predicated region
        $region25: #{tpu_custom_call.1} parent=11 // pred_check
          %p357 = pneg %p213
        $region26: #{tpu_custom_call.1} parent=11 // pred_check_branch
          %359 = sbr.rel (%p357) target = $region28
        $region27: #{tpu_custom_call.1} parent=11 // pred_region
          _
        $region28: #{tpu_custom_call.1} parent=11 // pred_fallthru
          _
        // Predicated region
        $region29: #{tpu_custom_call.1} parent=11 // pred_check
          %p360 = pneg %p234
        $region30: #{tpu_custom_call.1} parent=11 // pred_check_branch
          %362 = sbr.rel (%p360) target = $region32
        $region31: #{tpu_custom_call.1} parent=11 // pred_region
          %s364 = ssub.s32 1024, 1024
          %365 = vsyncadd [#allocation7], %s364
          %s366 = sshll.u32 [#allocation6], 4
          %s367 = int_to_ptr.vmem [resolvable:$true] %s366
          %372 = dma.hbm_to_vmem [thread:$0]  %s8, 1024, %s367, [#allocation7], 64, 64, 4
        $region32: #{tpu_custom_call.1} parent=11 // pred_fallthru
          _
        // Predicated region
        $region33: #{tpu_custom_call.1} parent=11 // pred_check
          %p373 = pneg %p255
        $region34: #{tpu_custom_call.1} parent=11 // pred_check_branch
          %375 = sbr.rel (%p373) target = $region36
        $region35: #{tpu_custom_call.1} parent=11 // pred_region
          _
        $region36: #{tpu_custom_call.1} parent=11 // pred_fallthru
          _
        // Predicated region
        $region37: #{tpu_custom_call.1} parent=11 // pred_check
          %p376 = pneg %p276
        $region38: #{tpu_custom_call.1} parent=11 // pred_check_branch
          %378 = sbr.rel (%p376) target = $region40
        $region39: #{tpu_custom_call.1} parent=11 // pred_region
          _
        $region40: #{tpu_custom_call.1} parent=11 // pred_fallthru
          _
        // Predicated region
        $region41: #{tpu_custom_call.1} parent=11 // pred_check
          %p379 = pneg %p297
        $region42: #{tpu_custom_call.1} parent=11 // pred_check_branch
          %381 = sbr.rel (%p379) target = $region44
        $region43: #{tpu_custom_call.1} parent=11 // pred_region
          _
        $region44: #{tpu_custom_call.1} parent=11 // pred_fallthru
          _
      $region12: #{tpu_custom_call.1} parent=5 // pred_fallthru
        _
      %p382 = scmp.lt.s32.totalorder %s25, 2
      // Predicated region
      $region45: #{tpu_custom_call.1} parent=5 // pred_check
        %p383 = pneg %p382
      $region46: #{tpu_custom_call.1} parent=5 // pred_check_branch
        %385 = sbr.rel (%p383) target = $region48
      $region47: #{tpu_custom_call.1} parent=5 // pred_region
        // Predicated region
        $region49: #{tpu_custom_call.1} parent=47 // pred_check
          %p386 = pneg %p45
        $region50: #{tpu_custom_call.1} parent=47 // pred_check_branch
          %388 = sbr.rel (%p386) target = $region52
        $region51: #{tpu_custom_call.1} parent=47 // pred_region
          %s389 = smul.u32 16, %s25
          %p390 = scmp.lt.s32.totalorder %s389, 31
          %s391 = scalar_select %p390, %s389, 31
          %s392 = smul.addr %s391, 8
          %s393 = scalar_lea.vmem %s0, %s392
          %s394 = smul.u32 16, %s25
        $region52: #{tpu_custom_call.1} parent=47 // pred_fallthru
          _
        // Predicated region
        $region53: #{tpu_custom_call.1} parent=47 // pred_check
          %p395 = pneg %p71
        $region54: #{tpu_custom_call.1} parent=47 // pred_check_branch
          %397 = sbr.rel (%p395) target = $region56
        $region55: #{tpu_custom_call.1} parent=47 // pred_region
          %s398 = smul.u32 16, %s25
          %p399 = scmp.lt.s32.totalorder %s398, 31
          %s400 = scalar_select %p399, %s398, 31
          %s401 = smul.addr %s400, 8
          %s402 = scalar_lea.vmem %s1, %s401
          %s403 = smul.u32 16, %s25
        $region56: #{tpu_custom_call.1} parent=47 // pred_fallthru
          _
        // Predicated region
        $region57: #{tpu_custom_call.1} parent=47 // pred_check
          %p404 = pneg %p97
        $region58: #{tpu_custom_call.1} parent=47 // pred_check_branch
          %406 = sbr.rel (%p404) target = $region60
        $region59: #{tpu_custom_call.1} parent=47 // pred_region
          %s407 = smul.u32 16, %s25
          %p408 = scmp.lt.s32.totalorder %s407, 31
          %s409 = scalar_select %p408, %s407, 31
          %s410 = smul.addr %s409, 8
          %s411 = scalar_lea.vmem %s2, %s410
          %s412 = smul.u32 16, %s25
        $region60: #{tpu_custom_call.1} parent=47 // pred_fallthru
          _
        // Predicated region
        $region61: #{tpu_custom_call.1} parent=47 // pred_check
          %p413 = pneg %p123
        $region62: #{tpu_custom_call.1} parent=47 // pred_check_branch
          %415 = sbr.rel (%p413) target = $region64
        $region63: #{tpu_custom_call.1} parent=47 // pred_region
          %s416 = smul.u32 16, %s25
          %p417 = scmp.lt.s32.totalorder %s416, 31
          %s418 = scalar_select %p417, %s416, 31
          %s419 = smul.addr %s418, 8
          %s420 = scalar_lea.vmem %s3, %s419
          %s421 = smul.u32 16, %s25
        $region64: #{tpu_custom_call.1} parent=47 // pred_fallthru
          _
      $region48: #{tpu_custom_call.1} parent=5 // pred_fallthru
        _
      %p422 = scmp.le.s32.totalorder 1, %s25
      %p423 = scmp.lt.s32.totalorder %s25, 3
      %p424 = pnand %p422, %p423
      %p425 = pneg %p424
      // Predicated region
      $region65: #{tpu_custom_call.1} parent=5 // pred_check
        _
      $region66: #{tpu_custom_call.1} parent=5 // pred_check_branch
        %427 = sbr.rel (%p424) target = $region68
      $region67: #{tpu_custom_call.1} parent=5 // pred_region
        %s428 = ssub.s32 %s25, 1
        // Predicated region
        $region69: #{tpu_custom_call.1} parent=67 // pred_check
          %p429 = pneg %p150
        $region70: #{tpu_custom_call.1} parent=67 // pred_check_branch
          %431 = sbr.rel (%p429) target = $region72
        $region71: #{tpu_custom_call.1} parent=67 // pred_region
          %432 = dma.done [#allocation4], 3072
        $region72: #{tpu_custom_call.1} parent=67 // pred_fallthru
          _
        // Predicated region
        $region73: #{tpu_custom_call.1} parent=67 // pred_check
          %p433 = pneg %p234
        $region74: #{tpu_custom_call.1} parent=67 // pred_check_branch
          %435 = sbr.rel (%p433) target = $region76
        $region75: #{tpu_custom_call.1} parent=67 // pred_region
          %436 = dma.done [#allocation7], 1024
        $region76: #{tpu_custom_call.1} parent=67 // pred_fallthru
          _
        %s437 = smul.u32 16, %s30
        %p438 = scmp.lt.s32.totalorder %s437, 31
        %s439 = scalar_select %p438, %s437, 31
        %s440 = smul.addr %s439, 8
        %s441 = scalar_lea.vmem %s0, %s440
        %p442 = pneg %p51
        %p443 = pneg %p48
        %s444 = smul.u32 16, %s30
        %p445 = scmp.lt.s32.totalorder %s444, 31
        %s446 = scalar_select %p445, %s444, 31
        %s447 = smul.addr %s446, 8
        %s448 = scalar_lea.vmem %s1, %s447
        %p449 = pneg %p77
        %p450 = pneg %p74
        %s451 = smul.u32 16, %s30
        %p452 = scmp.lt.s32.totalorder %s451, 31
        %s453 = scalar_select %p452, %s451, 31
        %s454 = smul.addr %s453, 8
        %s455 = scalar_lea.vmem %s2, %s454
        %p456 = pneg %p103
        %p457 = pneg %p100
        %s458 = smul.u32 16, %s30
        %p459 = scmp.lt.s32.totalorder %s458, 31
        %s460 = scalar_select %p459, %s458, 31
        %s461 = smul.addr %s460, 8
        %s462 = scalar_lea.vmem %s3, %s461
        %p463 = pneg %p129
        %p464 = pneg %p126
        %p465 = pneg %p150
        %p466 = pneg %p147
        %p467 = pneg %p171
        %p468 = pneg %p168
        %p469 = pneg %p192
        %p470 = pneg %p189
        %p471 = pneg %p213
        %p472 = pneg %p210
        %p473 = pneg %p234
        %p474 = pneg %p231
        %p475 = pneg %p255
        %p476 = pneg %p252
        %p477 = pneg %p276
        %p478 = pneg %p273
        %p479 = pneg %p297
        %p480 = pneg %p294
        %p481 = pneg %p323
        %p482 = pneg %p320
        %s483 = sand.u32 %s310, 1
        %s484 = scalar_lea.sflag [#allocation5], %s483
        %s485 = sand.u32 %s310, 1
        %s486 = scalar_lea.vmem [#allocation8], %s485
        %s487 = smul.u32 16, %s30
        %p488 = scmp.lt.s32.totalorder %s487, 31
        %s489 = scalar_select %p488, %s487, 31
        %s490 = smul.addr %s489, 8
        %s491 = scalar_lea.vmem %s0, %s490
        %s492 = smul.u32 16, %s30
        %s493 = smul.u32 16, %s30
        %p494 = scmp.lt.s32.totalorder %s493, 31
        %s495 = scalar_select %p494, %s493, 31
        %s496 = smul.addr %s495, 8
        %s497 = scalar_lea.vmem %s1, %s496
        %s498 = smul.u32 16, %s30
        %s499 = smul.u32 16, %s30
        %p500 = scmp.lt.s32.totalorder %s499, 31
        %s501 = scalar_select %p500, %s499, 31
        %s502 = smul.addr %s501, 8
        %s503 = scalar_lea.vmem %s2, %s502
        %s504 = smul.u32 16, %s30
        %s505 = smul.u32 16, %s30
        %p506 = scmp.lt.s32.totalorder %s505, 31
        %s507 = scalar_select %p506, %s505, 31
        %s508 = smul.addr %s507, 8
        %s509 = scalar_lea.vmem %s3, %s508
        %s510 = smul.u32 16, %s30
        %v512 = vld [vmem:[%s491] sm:$0xff]
        %v513 = vld [vmem:[%s491 + $0x8] sm:$0xff]
        %v514 = vld [vmem:[%s491 + $0x10] sm:$0xff]
        %v515 = vld [vmem:[%s491 + $0x18] sm:$0xff]
        %v516 = vld [vmem:[%s491 + $0x20] sm:$0xff]
        %v517 = vld [vmem:[%s491 + $0x28] sm:$0xff]
        %v518 = vld [vmem:[%s491 + $0x30] sm:$0xff]
        %v519 = vld [vmem:[%s491 + $0x38] sm:$0xff]
        %v520 = vld [vmem:[%s491 + $0x40] sm:$0xff]
        %v521 = vld [vmem:[%s491 + $0x48] sm:$0xff]
        %v522 = vld [vmem:[%s491 + $0x50] sm:$0xff]
        %v523 = vld [vmem:[%s491 + $0x58] sm:$0xff]
        %v524 = vld [vmem:[%s491 + $0x60] sm:$0xff]
        %v525 = vld [vmem:[%s491 + $0x68] sm:$0xff]
        %v526 = vld [vmem:[%s491 + $0x70] sm:$0xff]
        %v527 = vld [vmem:[%s491 + $0x78] sm:$0xff]
        %v528 = vld [vmem:[%s497] sm:$0xff]
        %v529 = vld [vmem:[%s497 + $0x8] sm:$0xff]
        %v530 = vld [vmem:[%s497 + $0x10] sm:$0xff]
        %v531 = vld [vmem:[%s497 + $0x18] sm:$0xff]
        %v532 = vld [vmem:[%s497 + $0x20] sm:$0xff]
        %v533 = vld [vmem:[%s497 + $0x28] sm:$0xff]
        %v534 = vld [vmem:[%s497 + $0x30] sm:$0xff]
        %v535 = vld [vmem:[%s497 + $0x38] sm:$0xff]
        %v536 = vld [vmem:[%s497 + $0x40] sm:$0xff]
        %v537 = vld [vmem:[%s497 + $0x48] sm:$0xff]
        %v538 = vld [vmem:[%s497 + $0x50] sm:$0xff]
        %v539 = vld [vmem:[%s497 + $0x58] sm:$0xff]
        %v540 = vld [vmem:[%s497 + $0x60] sm:$0xff]
        %v541 = vld [vmem:[%s497 + $0x68] sm:$0xff]
        %v542 = vld [vmem:[%s497 + $0x70] sm:$0xff]
        %v543 = vld [vmem:[%s497 + $0x78] sm:$0xff]
        %v544 = vmul.f32 %v512, %v528
        %v545 = vmul.f32 %v513, %v529
        %v546 = vmul.f32 %v514, %v530
        %v547 = vmul.f32 %v515, %v531
        %v548 = vmul.f32 %v516, %v532
        %v549 = vmul.f32 %v517, %v533
        %v550 = vmul.f32 %v518, %v534
        %v551 = vmul.f32 %v519, %v535
        %v552 = vmul.f32 %v520, %v536
        %v553 = vmul.f32 %v521, %v537
        %v554 = vmul.f32 %v522, %v538
        %v555 = vmul.f32 %v523, %v539
        %v556 = vmul.f32 %v524, %v540
        %v557 = vmul.f32 %v525, %v541
        %v558 = vmul.f32 %v526, %v542
        %v559 = vmul.f32 %v527, %v543
        %v560 = vpack.c.bf16 %v513, %v512
        %v561 = vpack.c.bf16 %v515, %v514
        %v562 = vpack.c.bf16 %v517, %v516
        %v563 = vpack.c.bf16 %v519, %v518
        %v564 = vpack.c.bf16 %v521, %v520
        %v565 = vpack.c.bf16 %v523, %v522
        %v566 = vpack.c.bf16 %v525, %v524
        %v567 = vpack.c.bf16 %v527, %v526
        %v568 = vpack.c.bf16 %v529, %v528
        %v569 = vpack.c.bf16 %v531, %v530
        %v570 = vpack.c.bf16 %v533, %v532
        %v571 = vpack.c.bf16 %v535, %v534
        %v572 = vpack.c.bf16 %v537, %v536
        %v573 = vpack.c.bf16 %v539, %v538
        %v574 = vpack.c.bf16 %v541, %v540
        %v575 = vpack.c.bf16 %v543, %v542
        %v576 = vpack.c.bf16 %v545, %v544
        %v577 = vpack.c.bf16 %v547, %v546
        %v578 = vpack.c.bf16 %v549, %v548
        %v579 = vpack.c.bf16 %v551, %v550
        %v580 = vpack.c.bf16 %v553, %v552
        %v581 = vpack.c.bf16 %v555, %v554
        %v582 = vpack.c.bf16 %v557, %v556
        %v583 = vpack.c.bf16 %v559, %v558
        %v584 = vld [vmem:[#allocation3] sm:$0xf]
        %v585 = vld [vmem:[#allocation3 + $0x4] sm:$0xf]
        %v586 = vld [vmem:[#allocation3 + $0x8] sm:$0xf]
        %v587 = vld [vmem:[#allocation3 + $0xc] sm:$0xf]
        %v588 = vld [vmem:[#allocation3 + $0x10] sm:$0xf]
        %v589 = vld [vmem:[#allocation3 + $0x14] sm:$0xf]
        %v590 = vld [vmem:[#allocation3 + $0x18] sm:$0xf]
        %v591 = vld [vmem:[#allocation3 + $0x1c] sm:$0xf]
        %v592 = vld [vmem:[#allocation3 + $0x20] sm:$0xf]
        %v593 = vld [vmem:[#allocation3 + $0x24] sm:$0xf]
        %v594 = vld [vmem:[#allocation3 + $0x28] sm:$0xf]
        %v595 = vld [vmem:[#allocation3 + $0x2c] sm:$0xf]
        %v596 = vld [vmem:[#allocation3 + $0x30] sm:$0xf]
        %v597 = vld [vmem:[#allocation3 + $0x34] sm:$0xf]
        %v598 = vld [vmem:[#allocation3 + $0x38] sm:$0xf]
        %v599 = vld [vmem:[#allocation3 + $0x3c] sm:$0xf]
        %v600 = vld [vmem:[#allocation3 + $0x40] sm:$0xf]
        %v601 = vld [vmem:[#allocation3 + $0x44] sm:$0xf]
        %v602 = vld [vmem:[#allocation3 + $0x48] sm:$0xf]
        %v603 = vld [vmem:[#allocation3 + $0x4c] sm:$0xf]
        %v604 = vld [vmem:[#allocation3 + $0x50] sm:$0xf]
        %v605 = vld [vmem:[#allocation3 + $0x54] sm:$0xf]
        %v606 = vld [vmem:[#allocation3 + $0x58] sm:$0xf]
        %v607 = vld [vmem:[#allocation3 + $0x5c] sm:$0xf]
        %v608 = vld [vmem:[#allocation3 + $0x60] sm:$0xf]
        %v609 = vld [vmem:[#allocation3 + $0x64] sm:$0xf]
        %v610 = vld [vmem:[#allocation3 + $0x68] sm:$0xf]
        %v611 = vld [vmem:[#allocation3 + $0x6c] sm:$0xf]
        %v612 = vld [vmem:[#allocation3 + $0x70] sm:$0xf]
        %v613 = vld [vmem:[#allocation3 + $0x74] sm:$0xf]
        %v614 = vld [vmem:[#allocation3 + $0x78] sm:$0xf]
        %v615 = vld [vmem:[#allocation3 + $0x7c] sm:$0xf]
        %v616 = vld [vmem:[#allocation3 + $0x80] sm:$0xf]
        %v617 = vld [vmem:[#allocation3 + $0x84] sm:$0xf]
        %v618 = vld [vmem:[#allocation3 + $0x88] sm:$0xf]
        %v619 = vld [vmem:[#allocation3 + $0x8c] sm:$0xf]
        %v620 = vld [vmem:[#allocation3 + $0x90] sm:$0xf]
        %v621 = vld [vmem:[#allocation3 + $0x94] sm:$0xf]
        %v622 = vld [vmem:[#allocation3 + $0x98] sm:$0xf]
        %v623 = vld [vmem:[#allocation3 + $0x9c] sm:$0xf]
        %v624 = vld [vmem:[#allocation3 + $0xa0] sm:$0xf]
        %v625 = vld [vmem:[#allocation3 + $0xa4] sm:$0xf]
        %v626 = vld [vmem:[#allocation3 + $0xa8] sm:$0xf]
        %v627 = vld [vmem:[#allocation3 + $0xac] sm:$0xf]
        %v628 = vld [vmem:[#allocation3 + $0xb0] sm:$0xf]
        %v629 = vld [vmem:[#allocation3 + $0xb4] sm:$0xf]
        %v630 = vld [vmem:[#allocation3 + $0xb8] sm:$0xf]
        %v631 = vld [vmem:[#allocation3 + $0xbc] sm:$0xf]
        %v632 = vld [vmem:[%s503] sm:$0xff]
        %v633 = vld [vmem:[%s503 + $0x8] sm:$0xff]
        %v634 = vld [vmem:[%s503 + $0x10] sm:$0xff]
        %v635 = vld [vmem:[%s503 + $0x18] sm:$0xff]
        %v636 = vld [vmem:[%s503 + $0x20] sm:$0xff]
        %v637 = vld [vmem:[%s503 + $0x28] sm:$0xff]
        %v638 = vld [vmem:[%s503 + $0x30] sm:$0xff]
        %v639 = vld [vmem:[%s503 + $0x38] sm:$0xff]
        %v640 = vld [vmem:[%s503 + $0x40] sm:$0xff]
        %v641 = vld [vmem:[%s503 + $0x48] sm:$0xff]
        %v642 = vld [vmem:[%s503 + $0x50] sm:$0xff]
        %v643 = vld [vmem:[%s503 + $0x58] sm:$0xff]
        %v644 = vld [vmem:[%s503 + $0x60] sm:$0xff]
        %v645 = vld [vmem:[%s503 + $0x68] sm:$0xff]
        %v646 = vld [vmem:[%s503 + $0x70] sm:$0xff]
        %v647 = vld [vmem:[%s503 + $0x78] sm:$0xff]
        %v648 = vld [vmem:[%s5] sm:$0x1]
        %650 = vset.pattern.permute.xlu0 0
        %651 = vperm.xlu0 %650, %v632
        %v652 = vpop.permute.xlu0 %651
        %655 = vset.pattern.permute.xlu0 0
        %656 = vperm.xlu0 %655, %v633
        %v657 = vpop.permute.xlu0 %656
        %660 = vset.pattern.permute.xlu0 0
        %661 = vperm.xlu0 %660, %v634
        %v662 = vpop.permute.xlu0 %661
        %665 = vset.pattern.permute.xlu0 0
        %666 = vperm.xlu0 %665, %v635
        %v667 = vpop.permute.xlu0 %666
        %670 = vset.pattern.permute.xlu0 0
        %671 = vperm.xlu0 %670, %v636
        %v672 = vpop.permute.xlu0 %671
        %675 = vset.pattern.permute.xlu0 0
        %676 = vperm.xlu0 %675, %v637
        %v677 = vpop.permute.xlu0 %676
        %680 = vset.pattern.permute.xlu0 0
        %681 = vperm.xlu0 %680, %v638
        %v682 = vpop.permute.xlu0 %681
        %685 = vset.pattern.permute.xlu0 0
        %686 = vperm.xlu0 %685, %v639
        %v687 = vpop.permute.xlu0 %686
        %690 = vset.pattern.permute.xlu0 0
        %691 = vperm.xlu0 %690, %v640
        %v692 = vpop.permute.xlu0 %691
        %695 = vset.pattern.permute.xlu0 0
        %696 = vperm.xlu0 %695, %v641
        %v697 = vpop.permute.xlu0 %696
        %700 = vset.pattern.permute.xlu0 0
        %701 = vperm.xlu0 %700, %v642
        %v702 = vpop.permute.xlu0 %701
        %705 = vset.pattern.permute.xlu0 0
        %706 = vperm.xlu0 %705, %v643
        %v707 = vpop.permute.xlu0 %706
        %710 = vset.pattern.permute.xlu0 0
        %711 = vperm.xlu0 %710, %v644
        %v712 = vpop.permute.xlu0 %711
        %715 = vset.pattern.permute.xlu0 0
        %716 = vperm.xlu0 %715, %v645
        %v717 = vpop.permute.xlu0 %716
        %720 = vset.pattern.permute.xlu0 0
        %721 = vperm.xlu0 %720, %v646
        %v722 = vpop.permute.xlu0 %721
        %725 = vset.pattern.permute.xlu0 0
        %726 = vperm.xlu0 %725, %v647
        %v727 = vpop.permute.xlu0 %726
        %v730 = vlaneseq
        %v731 = vshrl.u32 %v730, 7
        %v732 = vsub.s32 0, %v731
        %v733 = vrot.slane %v648, %v732
        %v735 = vmul.f32 %v652, %v733
        %v736 = vmul.f32 %v657, %v733
        %v737 = vmul.f32 %v662, %v733
        %v738 = vmul.f32 %v667, %v733
        %v739 = vmul.f32 %v672, %v733
        %v740 = vmul.f32 %v677, %v733
        %v741 = vmul.f32 %v682, %v733
        %v742 = vmul.f32 %v687, %v733
        %v743 = vmul.f32 %v692, %v733
        %v744 = vmul.f32 %v697, %v733
        %v745 = vmul.f32 %v702, %v733
        %v746 = vmul.f32 %v707, %v733
        %v747 = vmul.f32 %v712, %v733
        %v748 = vmul.f32 %v717, %v733
        %v749 = vmul.f32 %v722, %v733
        %v750 = vmul.f32 %v727, %v733
        %v751 = vld [vmem:[%s509] sm:$0xff]
        %v752 = vld [vmem:[%s509 + $0x8] sm:$0xff]
        %v753 = vld [vmem:[%s509 + $0x10] sm:$0xff]
        %v754 = vld [vmem:[%s509 + $0x18] sm:$0xff]
        %v755 = vld [vmem:[%s509 + $0x20] sm:$0xff]
        %v756 = vld [vmem:[%s509 + $0x28] sm:$0xff]
        %v757 = vld [vmem:[%s509 + $0x30] sm:$0xff]
        %v758 = vld [vmem:[%s509 + $0x38] sm:$0xff]
        %v759 = vld [vmem:[%s509 + $0x40] sm:$0xff]
        %v760 = vld [vmem:[%s509 + $0x48] sm:$0xff]
        %v761 = vld [vmem:[%s509 + $0x50] sm:$0xff]
        %v762 = vld [vmem:[%s509 + $0x58] sm:$0xff]
        %v763 = vld [vmem:[%s509 + $0x60] sm:$0xff]
        %v764 = vld [vmem:[%s509 + $0x68] sm:$0xff]
        %v765 = vld [vmem:[%s509 + $0x70] sm:$0xff]
        %v766 = vld [vmem:[%s509 + $0x78] sm:$0xff]
        %v767 = vld [vmem:[%s6] sm:$0x1]
        %769 = vset.pattern.permute.xlu0 0
        %770 = vperm.xlu0 %769, %v751
        %v771 = vpop.permute.xlu0 %770
        %774 = vset.pattern.permute.xlu0 0
        %775 = vperm.xlu0 %774, %v752
        %v776 = vpop.permute.xlu0 %775
        %779 = vset.pattern.permute.xlu0 0
        %780 = vperm.xlu0 %779, %v753
        %v781 = vpop.permute.xlu0 %780
        %784 = vset.pattern.permute.xlu0 0
        %785 = vperm.xlu0 %784, %v754
        %v786 = vpop.permute.xlu0 %785
        %789 = vset.pattern.permute.xlu0 0
        %790 = vperm.xlu0 %789, %v755
        %v791 = vpop.permute.xlu0 %790
        %794 = vset.pattern.permute.xlu0 0
        %795 = vperm.xlu0 %794, %v756
        %v796 = vpop.permute.xlu0 %795
        %799 = vset.pattern.permute.xlu0 0
        %800 = vperm.xlu0 %799, %v757
        %v801 = vpop.permute.xlu0 %800
        %804 = vset.pattern.permute.xlu0 0
        %805 = vperm.xlu0 %804, %v758
        %v806 = vpop.permute.xlu0 %805
        %809 = vset.pattern.permute.xlu0 0
        %810 = vperm.xlu0 %809, %v759
        %v811 = vpop.permute.xlu0 %810
        %814 = vset.pattern.permute.xlu0 0
        %815 = vperm.xlu0 %814, %v760
        %v816 = vpop.permute.xlu0 %815
        %819 = vset.pattern.permute.xlu0 0
        %820 = vperm.xlu0 %819, %v761
        %v821 = vpop.permute.xlu0 %820
        %824 = vset.pattern.permute.xlu0 0
        %825 = vperm.xlu0 %824, %v762
        %v826 = vpop.permute.xlu0 %825
        %829 = vset.pattern.permute.xlu0 0
        %830 = vperm.xlu0 %829, %v763
        %v831 = vpop.permute.xlu0 %830
        %834 = vset.pattern.permute.xlu0 0
        %835 = vperm.xlu0 %834, %v764
        %v836 = vpop.permute.xlu0 %835
        %839 = vset.pattern.permute.xlu0 0
        %840 = vperm.xlu0 %839, %v765
        %v841 = vpop.permute.xlu0 %840
        %844 = vset.pattern.permute.xlu0 0
        %845 = vperm.xlu0 %844, %v766
        %v846 = vpop.permute.xlu0 %845
        %v849 = vlaneseq
        %v850 = vshrl.u32 %v849, 7
        %v851 = vsub.s32 0, %v850
        %v852 = vrot.slane %v767, %v851
        %v854 = vmul.f32 %v771, %v852
        %v855 = vmul.f32 %v776, %v852
        %v856 = vmul.f32 %v781, %v852
        %v857 = vmul.f32 %v786, %v852
        %v858 = vmul.f32 %v791, %v852
        %v859 = vmul.f32 %v796, %v852
        %v860 = vmul.f32 %v801, %v852
        %v861 = vmul.f32 %v806, %v852
        %v862 = vmul.f32 %v811, %v852
        %v863 = vmul.f32 %v816, %v852
        %v864 = vmul.f32 %v821, %v852
        %v865 = vmul.f32 %v826, %v852
        %v866 = vmul.f32 %v831, %v852
        %v867 = vmul.f32 %v836, %v852
        %v868 = vmul.f32 %v841, %v852
        %v869 = vmul.f32 %v846, %v852
        %v870 = vadd.f32 %v735, %v854
        %v871 = vadd.f32 %v736, %v855
        %v872 = vadd.f32 %v737, %v856
        %v873 = vadd.f32 %v738, %v857
        %v874 = vadd.f32 %v739, %v858
        %v875 = vadd.f32 %v740, %v859
        %v876 = vadd.f32 %v741, %v860
        %v877 = vadd.f32 %v742, %v861
        %v878 = vadd.f32 %v743, %v862
        %v879 = vadd.f32 %v744, %v863
        %v880 = vadd.f32 %v745, %v864
        %v881 = vadd.f32 %v746, %v865
        %v882 = vadd.f32 %v747, %v866
        %v883 = vadd.f32 %v748, %v867
        %v884 = vadd.f32 %v749, %v868
        %v885 = vadd.f32 %v750, %v869
        %v886 = vld [vmem:[%s7] sm:$0x1]
        %v888 = vlaneseq
        %v889 = vshrl.u32 %v888, 7
        %v890 = vsub.s32 0, %v889
        %v891 = vrot.slane %v886, %v890
        %v893 = vadd.f32 %v870, %v891
        %v894 = vadd.f32 %v871, %v891
        %v895 = vadd.f32 %v872, %v891
        %v896 = vadd.f32 %v873, %v891
        %v897 = vadd.f32 %v874, %v891
        %v898 = vadd.f32 %v875, %v891
        %v899 = vadd.f32 %v876, %v891
        %v900 = vadd.f32 %v877, %v891
        %v901 = vadd.f32 %v878, %v891
        %v902 = vadd.f32 %v879, %v891
        %v903 = vadd.f32 %v880, %v891
        %v904 = vadd.f32 %v881, %v891
        %v905 = vadd.f32 %v882, %v891
        %v906 = vadd.f32 %v883, %v891
        %v907 = vadd.f32 %v884, %v891
        %v908 = vadd.f32 %v885, %v891
        %v957 = vunpack.c.l.b16 %v584
        %v958 = vunpack.c.l.b16 %v585
        %v959 = vunpack.c.l.b16 %v586
        %v960 = vunpack.c.l.b16 %v587
        %v961 = vunpack.c.l.b16 %v588
        %v962 = vunpack.c.l.b16 %v589
        %v963 = vunpack.c.l.b16 %v590
        %v964 = vunpack.c.l.b16 %v591
        %v965 = vunpack.c.l.b16 %v592
        %v966 = vunpack.c.l.b16 %v593
        %v967 = vunpack.c.l.b16 %v594
        %v968 = vunpack.c.l.b16 %v595
        %v969 = vunpack.c.l.b16 %v596
        %v970 = vunpack.c.l.b16 %v597
        %v971 = vunpack.c.l.b16 %v598
        %v972 = vunpack.c.l.b16 %v599
        %v973 = vunpack.c.l.b16 %v600
        %v974 = vunpack.c.l.b16 %v601
        %v975 = vunpack.c.l.b16 %v602
        %v976 = vunpack.c.l.b16 %v603
        %v977 = vunpack.c.l.b16 %v604
        %v978 = vunpack.c.l.b16 %v605
        %v979 = vunpack.c.l.b16 %v606
        %v980 = vunpack.c.l.b16 %v607
        %v981 = vunpack.c.l.b16 %v608
        %v982 = vunpack.c.l.b16 %v609
        %v983 = vunpack.c.l.b16 %v610
        %v984 = vunpack.c.l.b16 %v611
        %v985 = vunpack.c.l.b16 %v612
        %v986 = vunpack.c.l.b16 %v613
        %v987 = vunpack.c.l.b16 %v614
        %v988 = vunpack.c.l.b16 %v615
        %v989 = vunpack.c.l.b16 %v616
        %v990 = vunpack.c.l.b16 %v617
        %v991 = vunpack.c.l.b16 %v618
        %v992 = vunpack.c.l.b16 %v619
        %v993 = vunpack.c.l.b16 %v620
        %v994 = vunpack.c.l.b16 %v621
        %v995 = vunpack.c.l.b16 %v622
        %v996 = vunpack.c.l.b16 %v623
        %v997 = vunpack.c.l.b16 %v624
        %v998 = vunpack.c.l.b16 %v625
        %v999 = vunpack.c.l.b16 %v626
        %v1000 = vunpack.c.l.b16 %v627
        %v1001 = vunpack.c.l.b16 %v628
        %v1002 = vunpack.c.l.b16 %v629
        %v1003 = vunpack.c.l.b16 %v630
        %v1004 = vunpack.c.l.b16 %v631
        %v1005 = vpack.c.b16 %v958, %v957
        %v1006 = vpack.c.b16 %v960, %v959
        %v1007 = vpack.c.b16 %v962, %v961
        %v1008 = vpack.c.b16 %v964, %v963
        %v1009 = vpack.c.b16 %v966, %v965
        %v1010 = vpack.c.b16 %v968, %v967
        %v1011 = vpack.c.b16 %v970, %v969
        %v1012 = vpack.c.b16 %v972, %v971
        %v1013 = vpack.c.b16 %v974, %v973
        %v1014 = vpack.c.b16 %v976, %v975
        %v1015 = vpack.c.b16 %v978, %v977
        %v1016 = vpack.c.b16 %v980, %v979
        %v1017 = vpack.c.b16 %v982, %v981
        %v1018 = vpack.c.b16 %v984, %v983
        %v1019 = vpack.c.b16 %v986, %v985
        %v1020 = vpack.c.b16 %v988, %v987
        %v1021 = vpack.c.b16 %v990, %v989
        %v1022 = vpack.c.b16 %v992, %v991
        %v1023 = vpack.c.b16 %v994, %v993
        %v1024 = vpack.c.b16 %v996, %v995
        %v1025 = vpack.c.b16 %v998, %v997
        %v1026 = vpack.c.b16 %v1000, %v999
        %v1027 = vpack.c.b16 %v1002, %v1001
        %v1028 = vpack.c.b16 %v1004, %v1003
        %1053 = vmatprep.subr.bf16.mxu0 0
        %1054 = vmatpush1.bf16.msra.mxu0 %v1005
        %1055 = vmatprep.subr.bf16.mxu0 0
        %1056 = vmatpush1.bf16.msra.mxu0 %v1006
        %1057 = vmatprep.subr.bf16.mxu0 0
        %1058 = vmatpush1.bf16.msra.mxu0 %v1007
        %1059 = vmatprep.subr.bf16.mxu0 0
        %1060 = vmatpush1.bf16.msra.mxu0 %v1008
        %1061 = vmatprep.subr.bf16.mxu0 0
        %1062 = vmatpush1.bf16.msra.mxu0 %v1009
        %1063 = vmatprep.subr.bf16.mxu0 0
        %1064 = vmatpush1.bf16.msra.mxu0 %v1010
        %1065 = vmatprep.subr.bf16.mxu0 0
        %1066 = vmatpush1.bf16.msra.mxu0 %v1011
        %1067 = vmatprep.subr.bf16.mxu0 0
        %1068 = vmatpush1.bf16.msra.mxu0 %v1012
        %1069 = vmatprep.subr.bf16.mxu0 0
        %1070 = vmatpush1.bf16.msra.mxu0 %v1013
        %1071 = vmatprep.subr.bf16.mxu0 0
        %1072 = vmatpush1.bf16.msra.mxu0 %v1014
        %1073 = vmatprep.subr.bf16.mxu0 0
        %1074 = vmatpush1.bf16.msra.mxu0 %v1015
        %1075 = vmatprep.subr.bf16.mxu0 0
        %1076 = vmatpush1.bf16.msra.mxu0 %v1016
        %1077 = vmatprep.subr.bf16.mxu0 0
        %1078 = vmatpush1.bf16.msra.mxu0 %v1017
        %1079 = vmatprep.subr.bf16.mxu0 0
        %1080 = vmatpush1.bf16.msra.mxu0 %v1018
        %1081 = vmatprep.subr.bf16.mxu0 0
        %1082 = vmatpush1.bf16.msra.mxu0 %v1019
        %1083 = vmatprep.subr.bf16.mxu0 0
        %1084 = vmatpush1.bf16.msra.mxu0 %v1020
        %1085 = vmatprep.mubr.bf16.mxu0 %v568
        %1086 = vmatmul.mubr.bf16.gmra.mrb[0].mxu0 %v560
        %v1087 = vpop.f32.mrb[0].mxu0
        %v1088 = vadd.f32 %v893, %v1087
        %v1089 = vpop.f32.mrb[0].mxu0
        %v1090 = vpop.f32.mrb[0].mxu0
        %v1091 = vadd.f32 %v894, %v1090
        %v1092 = vpop.f32.mrb[0].mxu0
        %1093 = vmatprep.mubr.bf16.mxu0 %v569
        %1094 = vmatmul.mubr.bf16.gmra.mrb[0].mxu0 %v561
        %v1095 = vpop.f32.mrb[0].mxu0
        %v1096 = vadd.f32 %v895, %v1095
        %v1097 = vpop.f32.mrb[0].mxu0
        %v1098 = vpop.f32.mrb[0].mxu0
        %v1099 = vadd.f32 %v896, %v1098
        %v1100 = vpop.f32.mrb[0].mxu0
        %1101 = vmatprep.mubr.bf16.mxu0 %v570
        %1102 = vmatmul.mubr.bf16.gmra.mrb[0].mxu0 %v562
        %v1103 = vpop.f32.mrb[0].mxu0
        %v1104 = vadd.f32 %v897, %v1103
        %v1105 = vpop.f32.mrb[0].mxu0
        %v1106 = vpop.f32.mrb[0].mxu0
        %v1107 = vadd.f32 %v898, %v1106
        %v1108 = vpop.f32.mrb[0].mxu0
        %1109 = vmatprep.mubr.bf16.mxu0 %v571
        %1110 = vmatmul.mubr.bf16.gmra.mrb[0].mxu0 %v563
        %v1111 = vpop.f32.mrb[0].mxu0
        %v1112 = vadd.f32 %v899, %v1111
        %v1113 = vpop.f32.mrb[0].mxu0
        %v1114 = vpop.f32.mrb[0].mxu0
        %v1115 = vadd.f32 %v900, %v1114
        %v1116 = vpop.f32.mrb[0].mxu0
        %1117 = vmatprep.mubr.bf16.mxu0 %v572
        %1118 = vmatmul.mubr.bf16.gmra.mrb[0].mxu0 %v564
        %v1119 = vpop.f32.mrb[0].mxu0
        %v1120 = vadd.f32 %v901, %v1119
        %v1121 = vpop.f32.mrb[0].mxu0
        %v1122 = vpop.f32.mrb[0].mxu0
        %v1123 = vadd.f32 %v902, %v1122
        %v1124 = vpop.f32.mrb[0].mxu0
        %1125 = vmatprep.mubr.bf16.mxu0 %v573
        %1126 = vmatmul.mubr.bf16.gmra.mrb[0].mxu0 %v565
        %v1127 = vpop.f32.mrb[0].mxu0
        %v1128 = vadd.f32 %v903, %v1127
        %v1129 = vpop.f32.mrb[0].mxu0
        %v1130 = vpop.f32.mrb[0].mxu0
        %v1131 = vadd.f32 %v904, %v1130
        %v1132 = vpop.f32.mrb[0].mxu0
        %1133 = vmatprep.mubr.bf16.mxu0 %v574
        %1134 = vmatmul.mubr.bf16.gmra.mrb[0].mxu0 %v566
        %v1135 = vpop.f32.mrb[0].mxu0
        %v1136 = vadd.f32 %v905, %v1135
        %v1137 = vpop.f32.mrb[0].mxu0
        %v1138 = vpop.f32.mrb[0].mxu0
        %v1139 = vadd.f32 %v906, %v1138
        %v1140 = vpop.f32.mrb[0].mxu0
        %1141 = vmatprep.mubr.bf16.mxu0 %v575
        %1142 = vmatmul.mubr.bf16.gmra.mrb[0].mxu0 %v567
        %v1143 = vpop.f32.mrb[0].mxu0
        %v1144 = vadd.f32 %v907, %v1143
        %v1145 = vpop.f32.mrb[0].mxu0
        %v1146 = vpop.f32.mrb[0].mxu0
        %v1147 = vadd.f32 %v908, %v1146
        %v1148 = vpop.f32.mrb[0].mxu0
        %1149 = vdwg.mxu0
        %1150 = vmatprep.subr.bf16.mxu0 0
        %1151 = vmatpush1.bf16.msra.mxu0 %v1021
        %1152 = vmatprep.subr.bf16.mxu0 0
        %1153 = vmatpush1.bf16.msra.mxu0 %v1022
        %1154 = vmatprep.subr.bf16.mxu0 0
        %1155 = vmatpush1.bf16.msra.mxu0 %v1023
        %1156 = vmatprep.subr.bf16.mxu0 0
        %1157 = vmatpush1.bf16.msra.mxu0 %v1024
        %1158 = vmatprep.subr.bf16.mxu0 0
        %1159 = vmatpush1.bf16.msra.mxu0 %v1025
        %1160 = vmatprep.subr.bf16.mxu0 0
        %1161 = vmatpush1.bf16.msra.mxu0 %v1026
        %1162 = vmatprep.subr.bf16.mxu0 0
        %1163 = vmatpush1.bf16.msra.mxu0 %v1027
        %1164 = vmatprep.subr.bf16.mxu0 0
        %1165 = vmatpush1.bf16.msra.mxu0 %v1028
        %1166 = vmatprep.subr.bf16.mxu0 0
        %1167 = vmatpush1.bf16.msra.mxu0 0
        %1168 = vmatprep.subr.bf16.mxu0 0
        %1169 = vmatpush1.bf16.msra.mxu0 0
        %1170 = vmatprep.subr.bf16.mxu0 0
        %1171 = vmatpush1.bf16.msra.mxu0 0
        %1172 = vmatprep.subr.bf16.mxu0 0
        %1173 = vmatpush1.bf16.msra.mxu0 0
        %1174 = vmatprep.subr.bf16.mxu0 0
        %1175 = vmatpush1.bf16.msra.mxu0 0
        %1176 = vmatprep.subr.bf16.mxu0 0
        %1177 = vmatpush1.bf16.msra.mxu0 0
        %1178 = vmatprep.subr.bf16.mxu0 0
        %1179 = vmatpush1.bf16.msra.mxu0 0
        %1180 = vmatprep.subr.bf16.mxu0 0
        %1181 = vmatpush1.bf16.msra.mxu0 0
        %1182 = vmatprep.mubr.bf16.mxu0 0
        %1183 = vmatmul.mubr.bf16.gmra.mrb[0].mxu0 %v576
        %v1184 = vpop.f32.mrb[0].mxu0
        %v1185 = vadd.f32 %v1088, %v1184
        %v1186 = vpop.f32.mrb[0].mxu0
        %v1187 = vpop.f32.mrb[0].mxu0
        %v1188 = vadd.f32 %v1091, %v1187
        %v1189 = vpop.f32.mrb[0].mxu0
        %1190 = vmatprep.mubr.bf16.mxu0 0
        %1191 = vmatmul.mubr.bf16.gmra.mrb[0].mxu0 %v577
        %v1192 = vpop.f32.mrb[0].mxu0
        %v1193 = vadd.f32 %v1096, %v1192
        %v1194 = vpop.f32.mrb[0].mxu0
        %v1195 = vpop.f32.mrb[0].mxu0
        %v1196 = vadd.f32 %v1099, %v1195
        %v1197 = vpop.f32.mrb[0].mxu0
        %1198 = vmatprep.mubr.bf16.mxu0 0
        %1199 = vmatmul.mubr.bf16.gmra.mrb[0].mxu0 %v578
        %v1200 = vpop.f32.mrb[0].mxu0
        %v1201 = vadd.f32 %v1104, %v1200
        %v1202 = vpop.f32.mrb[0].mxu0
        %v1203 = vpop.f32.mrb[0].mxu0
        %v1204 = vadd.f32 %v1107, %v1203
        %v1205 = vpop.f32.mrb[0].mxu0
        %1206 = vmatprep.mubr.bf16.mxu0 0
        %1207 = vmatmul.mubr.bf16.gmra.mrb[0].mxu0 %v579
        %v1208 = vpop.f32.mrb[0].mxu0
        %v1209 = vadd.f32 %v1112, %v1208
        %v1210 = vpop.f32.mrb[0].mxu0
        %v1211 = vpop.f32.mrb[0].mxu0
        %v1212 = vadd.f32 %v1115, %v1211
        %v1213 = vpop.f32.mrb[0].mxu0
        %1214 = vmatprep.mubr.bf16.mxu0 0
        %1215 = vmatmul.mubr.bf16.gmra.mrb[0].mxu0 %v580
        %v1216 = vpop.f32.mrb[0].mxu0
        %v1217 = vadd.f32 %v1120, %v1216
        %v1218 = vpop.f32.mrb[0].mxu0
        %v1219 = vpop.f32.mrb[0].mxu0
        %v1220 = vadd.f32 %v1123, %v1219
        %v1221 = vpop.f32.mrb[0].mxu0
        %1222 = vmatprep.mubr.bf16.mxu0 0
        %1223 = vmatmul.mubr.bf16.gmra.mrb[0].mxu0 %v581
        %v1224 = vpop.f32.mrb[0].mxu0
        %v1225 = vadd.f32 %v1128, %v1224
        %v1226 = vpop.f32.mrb[0].mxu0
        %v1227 = vpop.f32.mrb[0].mxu0
        %v1228 = vadd.f32 %v1131, %v1227
        %v1229 = vpop.f32.mrb[0].mxu0
        %1230 = vmatprep.mubr.bf16.mxu0 0
        %1231 = vmatmul.mubr.bf16.gmra.mrb[0].mxu0 %v582
        %v1232 = vpop.f32.mrb[0].mxu0
        %v1233 = vadd.f32 %v1136, %v1232
        %v1234 = vpop.f32.mrb[0].mxu0
        %v1235 = vpop.f32.mrb[0].mxu0
        %v1236 = vadd.f32 %v1139, %v1235
        %v1237 = vpop.f32.mrb[0].mxu0
        %1238 = vmatprep.mubr.bf16.mxu0 0
        %1239 = vmatmul.mubr.bf16.gmra.mrb[0].mxu0 %v583
        %v1240 = vpop.f32.mrb[0].mxu0
        %v1241 = vadd.f32 %v1144, %v1240
        %v1242 = vpop.f32.mrb[0].mxu0
        %v1243 = vpop.f32.mrb[0].mxu0
        %v1244 = vadd.f32 %v1147, %v1243
        %v1245 = vpop.f32.mrb[0].mxu0
        %1246 = vdwg.mxu0
        %v1247 = vmax.f32 %v1185, 0.0
        %v1248 = vmax.f32 %v1188, 0.0
        %v1249 = vmax.f32 %v1193, 0.0
        %v1250 = vmax.f32 %v1196, 0.0
        %v1251 = vmax.f32 %v1201, 0.0
        %v1252 = vmax.f32 %v1204, 0.0
        %v1253 = vmax.f32 %v1209, 0.0
        %v1254 = vmax.f32 %v1212, 0.0
        %v1255 = vmax.f32 %v1217, 0.0
        %v1256 = vmax.f32 %v1220, 0.0
        %v1257 = vmax.f32 %v1225, 0.0
        %v1258 = vmax.f32 %v1228, 0.0
        %v1259 = vmax.f32 %v1233, 0.0
        %v1260 = vmax.f32 %v1236, 0.0
        %v1261 = vmax.f32 %v1241, 0.0
        %v1262 = vmax.f32 %v1244, 0.0
        %v1263 = vpack.c.bf16 %v1248, %v1247
        %v1264 = vpack.c.bf16 %v1250, %v1249
        %v1265 = vpack.c.bf16 %v1252, %v1251
        %v1266 = vpack.c.bf16 %v1254, %v1253
        %v1267 = vpack.c.bf16 %v1256, %v1255
        %v1268 = vpack.c.bf16 %v1258, %v1257
        %v1269 = vpack.c.bf16 %v1260, %v1259
        %v1270 = vpack.c.bf16 %v1262, %v1261
        %v1271 = vld [vmem:[#allocation6] sm:$0xf]
        %v1272 = vld [vmem:[#allocation6 + $0x4] sm:$0xf]
        %v1273 = vld [vmem:[#allocation6 + $0x8] sm:$0xf]
        %v1274 = vld [vmem:[#allocation6 + $0xc] sm:$0xf]
        %v1275 = vld [vmem:[#allocation6 + $0x10] sm:$0xf]
        %v1276 = vld [vmem:[#allocation6 + $0x14] sm:$0xf]
        %v1277 = vld [vmem:[#allocation6 + $0x18] sm:$0xf]
        %v1278 = vld [vmem:[#allocation6 + $0x1c] sm:$0xf]
        %v1279 = vld [vmem:[#allocation6 + $0x20] sm:$0xf]
        %v1280 = vld [vmem:[#allocation6 + $0x24] sm:$0xf]
        %v1281 = vld [vmem:[#allocation6 + $0x28] sm:$0xf]
        %v1282 = vld [vmem:[#allocation6 + $0x2c] sm:$0xf]
        %v1283 = vld [vmem:[#allocation6 + $0x30] sm:$0xf]
        %v1284 = vld [vmem:[#allocation6 + $0x34] sm:$0xf]
        %v1285 = vld [vmem:[#allocation6 + $0x38] sm:$0xf]
        %v1286 = vld [vmem:[#allocation6 + $0x3c] sm:$0xf]
        %v1287 = vld [vmem:[%s9] sm:$0x1]
        %v1289 = vlaneseq
        %v1290 = vshrl.u32 %v1289, 7
        %v1291 = vsub.s32 0, %v1290
        %v1292 = vrot.slane %v1287, %v1291
        %v1310 = vunpack.c.l.b16 %v1271
        %v1311 = vunpack.c.l.b16 %v1272
        %v1312 = vunpack.c.l.b16 %v1273
        %v1313 = vunpack.c.l.b16 %v1274
        %v1314 = vunpack.c.l.b16 %v1275
        %v1315 = vunpack.c.l.b16 %v1276
        %v1316 = vunpack.c.l.b16 %v1277
        %v1317 = vunpack.c.l.b16 %v1278
        %v1318 = vunpack.c.l.b16 %v1279
        %v1319 = vunpack.c.l.b16 %v1280
        %v1320 = vunpack.c.l.b16 %v1281
        %v1321 = vunpack.c.l.b16 %v1282
        %v1322 = vunpack.c.l.b16 %v1283
        %v1323 = vunpack.c.l.b16 %v1284
        %v1324 = vunpack.c.l.b16 %v1285
        %v1325 = vunpack.c.l.b16 %v1286
        %v1326 = vpack.c.b16 %v1311, %v1310
        %v1327 = vpack.c.b16 %v1313, %v1312
        %v1328 = vpack.c.b16 %v1315, %v1314
        %v1329 = vpack.c.b16 %v1317, %v1316
        %v1330 = vpack.c.b16 %v1319, %v1318
        %v1331 = vpack.c.b16 %v1321, %v1320
        %v1332 = vpack.c.b16 %v1323, %v1322
        %v1333 = vpack.c.b16 %v1325, %v1324
        %1342 = vmatprep.subr.bf16.mxu0 0
        %1343 = vmatpush1.bf16.msra.mxu0 %v1326
        %1344 = vmatprep.subr.bf16.mxu0 0
        %1345 = vmatpush1.bf16.msra.mxu0 %v1327
        %1346 = vmatprep.subr.bf16.mxu0 0
        %1347 = vmatpush1.bf16.msra.mxu0 %v1328
        %1348 = vmatprep.subr.bf16.mxu0 0
        %1349 = vmatpush1.bf16.msra.mxu0 %v1329
        %1350 = vmatprep.subr.bf16.mxu0 0
        %1351 = vmatpush1.bf16.msra.mxu0 %v1330
        %1352 = vmatprep.subr.bf16.mxu0 0
        %1353 = vmatpush1.bf16.msra.mxu0 %v1331
        %1354 = vmatprep.subr.bf16.mxu0 0
        %1355 = vmatpush1.bf16.msra.mxu0 %v1332
        %1356 = vmatprep.subr.bf16.mxu0 0
        %1357 = vmatpush1.bf16.msra.mxu0 %v1333
        %1358 = vmatprep.subr.bf16.mxu0 0
        %1359 = vmatpush1.bf16.msra.mxu0 0
        %1360 = vmatprep.subr.bf16.mxu0 0
        %1361 = vmatpush1.bf16.msra.mxu0 0
        %1362 = vmatprep.subr.bf16.mxu0 0
        %1363 = vmatpush1.bf16.msra.mxu0 0
        %1364 = vmatprep.subr.bf16.mxu0 0
        %1365 = vmatpush1.bf16.msra.mxu0 0
        %1366 = vmatprep.subr.bf16.mxu0 0
        %1367 = vmatpush1.bf16.msra.mxu0 0
        %1368 = vmatprep.subr.bf16.mxu0 0
        %1369 = vmatpush1.bf16.msra.mxu0 0
        %1370 = vmatprep.subr.bf16.mxu0 0
        %1371 = vmatpush1.bf16.msra.mxu0 0
        %1372 = vmatprep.subr.bf16.mxu0 0
        %1373 = vmatpush1.bf16.msra.mxu0 0
        %1374 = vmatprep.mubr.bf16.mxu0 0
        %1375 = vmatmul.mubr.bf16.gmra.mrb[0].mxu0 %v1263
        %v1376 = vpop.f32.mrb[0].mxu0
        %v1377 = vadd.f32 %v1292, %v1376
        %v1378 = vpop.f32.mrb[0].mxu0
        %v1379 = vpop.f32.mrb[0].mxu0
        %v1380 = vadd.f32 %v1292, %v1379
        %v1381 = vpop.f32.mrb[0].mxu0
        %1382 = vmatprep.mubr.bf16.mxu0 0
        %1383 = vmatmul.mubr.bf16.gmra.mrb[0].mxu0 %v1264
        %v1384 = vpop.f32.mrb[0].mxu0
        %v1385 = vadd.f32 %v1292, %v1384
        %v1386 = vpop.f32.mrb[0].mxu0
        %v1387 = vpop.f32.mrb[0].mxu0
        %v1388 = vadd.f32 %v1292, %v1387
        %v1389 = vpop.f32.mrb[0].mxu0
        %1390 = vmatprep.mubr.bf16.mxu0 0
        %1391 = vmatmul.mubr.bf16.gmra.mrb[0].mxu0 %v1265
        %v1392 = vpop.f32.mrb[0].mxu0
        %v1393 = vadd.f32 %v1292, %v1392
        %v1394 = vpop.f32.mrb[0].mxu0
        %v1395 = vpop.f32.mrb[0].mxu0
        %v1396 = vadd.f32 %v1292, %v1395
        %v1397 = vpop.f32.mrb[0].mxu0
        %1398 = vmatprep.mubr.bf16.mxu0 0
        %1399 = vmatmul.mubr.bf16.gmra.mrb[0].mxu0 %v1266
        %v1400 = vpop.f32.mrb[0].mxu0
        %v1401 = vadd.f32 %v1292, %v1400
        %v1402 = vpop.f32.mrb[0].mxu0
        %v1403 = vpop.f32.mrb[0].mxu0
        %v1404 = vadd.f32 %v1292, %v1403
        %v1405 = vpop.f32.mrb[0].mxu0
        %1406 = vmatprep.mubr.bf16.mxu0 0
        %1407 = vmatmul.mubr.bf16.gmra.mrb[0].mxu0 %v1267
        %v1408 = vpop.f32.mrb[0].mxu0
        %v1409 = vadd.f32 %v1292, %v1408
        %v1410 = vpop.f32.mrb[0].mxu0
        %v1411 = vpop.f32.mrb[0].mxu0
        %v1412 = vadd.f32 %v1292, %v1411
        %v1413 = vpop.f32.mrb[0].mxu0
        %1414 = vmatprep.mubr.bf16.mxu0 0
        %1415 = vmatmul.mubr.bf16.gmra.mrb[0].mxu0 %v1268
        %v1416 = vpop.f32.mrb[0].mxu0
        %v1417 = vadd.f32 %v1292, %v1416
        %v1418 = vpop.f32.mrb[0].mxu0
        %v1419 = vpop.f32.mrb[0].mxu0
        %v1420 = vadd.f32 %v1292, %v1419
        %v1421 = vpop.f32.mrb[0].mxu0
        %1422 = vmatprep.mubr.bf16.mxu0 0
        %1423 = vmatmul.mubr.bf16.gmra.mrb[0].mxu0 %v1269
        %v1424 = vpop.f32.mrb[0].mxu0
        %v1425 = vadd.f32 %v1292, %v1424
        %v1426 = vpop.f32.mrb[0].mxu0
        %v1427 = vpop.f32.mrb[0].mxu0
        %v1428 = vadd.f32 %v1292, %v1427
        %v1429 = vpop.f32.mrb[0].mxu0
        %1430 = vmatprep.mubr.bf16.mxu0 0
        %1431 = vmatmul.mubr.bf16.gmra.mrb[0].mxu0 %v1270
        %v1432 = vpop.f32.mrb[0].mxu0
        %v1433 = vadd.f32 %v1292, %v1432
        %v1434 = vpop.f32.mrb[0].mxu0
        %v1435 = vpop.f32.mrb[0].mxu0
        %v1436 = vadd.f32 %v1292, %v1435
        %v1437 = vpop.f32.mrb[0].mxu0
        %1438 = vdwg.mxu0
        %v1439 = vmax.f32 %v1377, 0.0
        %v1440 = vmax.f32 %v1380, 0.0
        %v1441 = vmax.f32 %v1385, 0.0
        %v1442 = vmax.f32 %v1388, 0.0
        %v1443 = vmax.f32 %v1393, 0.0
        %v1444 = vmax.f32 %v1396, 0.0
        %v1445 = vmax.f32 %v1401, 0.0
        %v1446 = vmax.f32 %v1404, 0.0
        %v1447 = vmax.f32 %v1409, 0.0
        %v1448 = vmax.f32 %v1412, 0.0
        %v1449 = vmax.f32 %v1417, 0.0
        %v1450 = vmax.f32 %v1420, 0.0
        %v1451 = vmax.f32 %v1425, 0.0
        %v1452 = vmax.f32 %v1428, 0.0
        %v1453 = vmax.f32 %v1433, 0.0
        %v1454 = vmax.f32 %v1436, 0.0
        %v1455 = vld [vmem:[%s10] sm:$0xff]
        %1456 = vmatprep.subr.mxu0 0.0
        %1457 = vmatpush1.xpose.msra.mxu0 %v1439
        %1458 = vmatprep.subr.mxu0 0.0
        %1459 = vmatpush1.xpose.msra.mxu0 %v1440
        %1460 = vmatprep.subr.mxu0 0.0
        %1461 = vmatpush1.xpose.msra.mxu0 %v1441
        %1462 = vmatprep.subr.mxu0 0.0
        %1463 = vmatpush1.xpose.msra.mxu0 %v1442
        %1464 = vmatprep.subr.mxu0 0.0
        %1465 = vmatpush1.xpose.msra.mxu0 %v1443
        %1466 = vmatprep.subr.mxu0 0.0
        %1467 = vmatpush1.xpose.msra.mxu0 %v1444
        %1468 = vmatprep.subr.mxu0 0.0
        %1469 = vmatpush1.xpose.msra.mxu0 %v1445
        %1470 = vmatprep.subr.mxu0 0.0
        %1471 = vmatpush1.xpose.msra.mxu0 %v1446
        %1472 = vmatprep.subr.mxu0 0.0
        %1473 = vmatpush1.xpose.msra.mxu0 %v1447
        %1474 = vmatprep.subr.mxu0 0.0
        %1475 = vmatpush1.xpose.msra.mxu0 %v1448
        %1476 = vmatprep.subr.mxu0 0.0
        %1477 = vmatpush1.xpose.msra.mxu0 %v1449
        %1478 = vmatprep.subr.mxu0 0.0
        %1479 = vmatpush1.xpose.msra.mxu0 %v1450
        %1480 = vmatprep.subr.mxu0 0.0
        %1481 = vmatpush1.xpose.msra.mxu0 %v1451
        %1482 = vmatprep.subr.mxu0 0.0
        %1483 = vmatpush1.xpose.msra.mxu0 %v1452
        %1484 = vmatprep.subr.mxu0 0.0
        %1485 = vmatpush1.xpose.msra.mxu0 %v1453
        %1486 = vmatprep.subr.mxu0 0.0
        %1487 = vmatpush1.xpose.msra.mxu0 %v1454
        %1488 = vmatprep.subr.mxu0 0.0
        %1489 = vmatpush1.xpose.msra.mxu0 0.0
        %1490 = vmatprep.subr.mxu0 0.0
        %1491 = vmatpush1.xpose.msra.mxu0 0.0
        %1492 = vmatprep.subr.mxu0 0.0
        %1493 = vmatpush1.xpose.msra.mxu0 0.0
        %1494 = vmatprep.subr.mxu0 0.0
        %1495 = vmatpush1.xpose.msra.mxu0 0.0
        %1496 = vmatprep.subr.mxu0 0.0
        %1497 = vmatpush1.xpose.msra.mxu0 0.0
        %1498 = vmatprep.subr.mxu0 0.0
        %1499 = vmatpush1.xpose.msra.mxu0 0.0
        %1500 = vmatprep.subr.mxu0 0.0
        %1501 = vmatpush1.xpose.msra.mxu0 0.0
        %1502 = vmatprep.subr.mxu0 0.0
        %1503 = vmatpush1.xpose.msra.mxu0 0.0
        %1504 = vmatprep.subr.mxu0 0.0
        %1505 = vmatpush1.xpose.msra.mxu0 0.0
        %1506 = vmatprep.subr.mxu0 0.0
        %1507 = vmatpush1.xpose.msra.mxu0 0.0
        %1508 = vmatprep.subr.mxu0 0.0
        %1509 = vmatpush1.xpose.msra.mxu0 0.0
        %1510 = vmatprep.subr.mxu0 0.0
        %1511 = vmatpush1.xpose.msra.mxu0 0.0
        %1512 = vmatprep.subr.mxu0 0.0
        %1513 = vmatpush1.xpose.msra.mxu0 0.0
        %1514 = vmatprep.subr.mxu0 0.0
        %1515 = vmatpush1.xpose.msra.mxu0 0.0
        %1516 = vmatprep.subr.mxu0 0.0
        %1517 = vmatpush1.xpose.msra.mxu0 0.0
        %1518 = vmatprep.subr.mxu0 0.0
        %1519 = vmatpush1.xpose.msra.mxu0 0.0
        %1520 = vmatprep.mubr.f32.mxu0 0.0
        %1521 = vmatmul.mubr.f32.gmra.mrb[0].mxu0 %v1455
        %v1522 = vpop.f32.mrb[0].mxu0
        %v1523 = vadd.f32 0.0, %v1522
        %v1524 = vpop.f32.mrb[0].mxu0
        %1525 = vdwg.mxu0
        %v1526 = vld [vmem:[#allocation2] sm:$0x1]
        %1528 = vset.pattern.permute.xlu0 0
        %1529 = vperm.xlu0 %1528, %v1526
        %v1530 = vpop.permute.xlu0 %1529
        %v1532 = vlaneseq
        %v1533 = vshrl.u32 %v1532, 7
        %v1534 = vsub.s32 0, %v1533
        %v1535 = vrot.slane %v1530, %v1534
        %v1536 = vadd.f32 %v1523, %v1535
        %1537 = vst [vmem:[%s486] sm:$0x1] %v1536
        %s1538 = sand.u32 %s310, 1
        %s1539 = scalar_lea.sflag [#allocation5], %s1538
        %s1540 = sand.u32 %s310, 1
        %s1541 = scalar_lea.vmem [#allocation8], %s1540
        // Predicated region
        $region77: #{tpu_custom_call.1} parent=67 // pred_check
          %p1542 = pneg %p320
        $region78: #{tpu_custom_call.1} parent=67 // pred_check_branch
          %1544 = sbr.rel (%p1542) target = $region80
        $region79: #{tpu_custom_call.1} parent=67 // pred_region
          %s1546 = ssub.s32 16, 16
          %1547 = vsyncadd %s1539, %s1546
          %s1548 = smul.addr %s30, 16
          %s1549 = scalar_lea.hbm %s12, %s1548
          %s1551 = sshll.u32 %s1541, 4
          %s1552 = int_to_ptr.vmem [resolvable:$true] %s1551
          %1554 = dma.vmem_to_hbm [thread:$0]  %s1552, 16, %s1549, %s1539
        $region80: #{tpu_custom_call.1} parent=67 // pred_fallthru
          _
      $region68: #{tpu_custom_call.1} parent=5 // pred_fallthru
        _
      %p1555 = scmp.le.s32.totalorder 2, %s25
      // Predicated region
      $region81: #{tpu_custom_call.1} parent=5 // pred_check
        %p1556 = pneg %p1555
      $region82: #{tpu_custom_call.1} parent=5 // pred_check_branch
        %1558 = sbr.rel (%p1556) target = $region84
      $region83: #{tpu_custom_call.1} parent=5 // pred_region
        %s1559 = ssub.s32 %s25, 2
        // Predicated region
        $region85: #{tpu_custom_call.1} parent=83 // pred_check
          %p1560 = pneg %p326
        $region86: #{tpu_custom_call.1} parent=83 // pred_check_branch
          %1562 = sbr.rel (%p1560) target = $region88
        $region87: #{tpu_custom_call.1} parent=83 // pred_region
          %s1563 = sand.u32 %s311, 1
          %s1564 = scalar_lea.sflag [#allocation5], %s1563
          %s1565 = sand.u32 %s311, 1
          %s1566 = scalar_lea.vmem [#allocation8], %s1565
          %1567 = dma.done %s1564, 16
        $region88: #{tpu_custom_call.1} parent=83 // pred_fallthru
          _
      $region84: #{tpu_custom_call.1} parent=5 // pred_fallthru
        _
    $region6: #{tpu_custom_call.1} parent=1 // loop_footer
      %s29 = sadd.s32 1, %s25
    $region7: #{tpu_custom_call.1} parent=1 // loop_footer_branch
      %24 = sbr.rel target = $region3
    $region8: #{tpu_custom_call.1} parent=1 // loop_exit
      _
    %1568 = vsyncpa [#allocation4], 1
    %s1569 = scalar_lea.sflag [#allocation4], 1
    %1570 = vsyncpa %s1569, 1
    %1571 = vsyncpa [#allocation7], 1
    %1572 = vsyncpa [#allocation5], 1
    %s1573 = scalar_lea.sflag [#allocation5], 1
    %1574 = vsyncpa %s1573, 1

</llo_original>
